<compile_context>
chip_gen: v5e
topology: v5e:2x2
jax: 0.10.0
libtpu: 0.0.40
codegen_flags: <defaults>
</compile_context>

<pallas_src>
import functools

import jax
import jax.numpy as jnp
from jax.experimental import pallas as pl
from jax.experimental.pallas import tpu as pltpu


LAYER_SIZES = [256, 512, 512]   # hidden sizes; in_dim / out_dim supplied at build time
PAD_OUT = 128                   # lane-padded width of the final layer output
SUBLANE = 16                    # bf16 sublane packing: batch tiles are multiples of 16
VMEM_LIMIT_BYTES = 48 * 1024 * 1024  # < v7x 64 MiB physical; above v5e 16 MiB scoped default


def _mlp_kernel(x_ref,
                w0_ref, b0_ref,
                w1_ref, b1_ref,
                w2_ref, b2_ref,
                w3_ref, b3_ref,
                o_ref):
    """Fused 4-layer MLP: (Linear -> ReLU) x 4 -> sigmoid, all in VMEM.

    Weights arrive bf16 (MXU fast path); accumulation, bias-add and ReLU are
    f32; activations are re-cast to bf16 only as matmul operands.
    """
    def layer(h_bf16, w_ref, b_ref):
        acc = jnp.dot(h_bf16, w_ref[...], preferred_element_type=jnp.float32)
        return jnp.maximum(acc + b_ref[...], 0.0)   # f32 bias-add + ReLU (VPU)

    # x arrives f32 (single HBM read, no separate wrapper cast pass); the bf16
    # cast here is cheap VPU filler that hides under the first MXU matmul.
    h = layer(x_ref[...].astype(jnp.bfloat16), w0_ref, b0_ref).astype(jnp.bfloat16)
    h = layer(h, w1_ref, b1_ref).astype(jnp.bfloat16)
    h = layer(h, w2_ref, b2_ref).astype(jnp.bfloat16)
    h = layer(h, w3_ref, b3_ref)                    # keep f32 for the epilogue

    # sigmoid = 1 / (1 + exp(-h)): exp and approx reciprocal both use the EUP
    # slot, keeping VALU slots free. Output stored as bf16 (lane-dense vst,
    # half the writeback bytes).
    o_ref[...] = pl.reciprocal(1.0 + jnp.exp(-h), approx=True).astype(o_ref.dtype)


def init_mlp_params(key, in_dim, out_dim=2, dtype=jnp.float32):
    """Deterministic init mimicking nn.Linear default (uniform +-1/sqrt(fan_in))."""
    sizes = [in_dim] + LAYER_SIZES + [out_dim]
    params = []
    for fi, fo in zip(sizes[:-1], sizes[1:]):
        key, kw, kb = jax.random.split(key, 3)
        bound = 1.0 / jnp.sqrt(jnp.asarray(fi, dtype))
        w = jax.random.uniform(kw, (fi, fo), dtype, -bound, bound)
        b = jax.random.uniform(kb, (1, fo), dtype, -bound, bound)
        params.append((w, b))
    return params


def prepare_params(params, out_dim=2):
    """One-time parameter prep (do NOT call per forward):

    * pads the final layer to PAD_OUT output lanes with zeros (lane-dense out),
    * casts weights to bf16 (MXU operands) and biases to f32 (added to the f32
      accumulator in-kernel).
    Returns a flat tuple (w0, b0, w1, b1, w2, b2, w3, b3).
    """
    params = list(params)
    w3, b3 = params[-1]
    pad = PAD_OUT - out_dim
    params[-1] = (jnp.pad(w3, ((0, 0), (0, pad))),
                  jnp.pad(b3, ((0, 0), (0, pad))))
    flat = []
    for w, b in params:
        flat.append(jnp.asarray(w, jnp.bfloat16))
        flat.append(jnp.asarray(b, jnp.float32).reshape(1, -1))
    return tuple(flat)


def _round_up(n, m):
    return ((n + m - 1) // m) * m


@functools.partial(jax.jit, static_argnames=("out_dim", "batch_tile"))
def mlp_forward(x, prepared, out_dim=2, batch_tile=2048):
    """Run the fused MLP kernel.

    x: [B, in_dim] float32. prepared: output of prepare_params().
    Returns [B, out_dim] float32.
    """
    B, in_dim = x.shape
    weights = prepared[0::2]
    biases = prepared[1::2]

    # Tile choice: as large as possible (amortizes the ~0.35 us per-grid-step
    # pipeline overhead), but capped at ceil(B/2) rounded to 16 so that large
    # batches always give >= 2 grid steps (both v7x TensorCores get work).
    B16 = _round_up(B, SUBLANE)
    half = max(SUBLANE, _round_up((B16 + 1) // 2, SUBLANE))
    tile = min(_round_up(batch_tile, SUBLANE), half)
    B_pad = _round_up(B16, tile)
    if B_pad != B:
        x = jnp.pad(x, ((0, B_pad - B), (0, 0)))

    grid = (B_pad // tile,)

    def resident(shape):
        # Grid-invariant operand: constant block index -> DMA'd once by the
        # pipeliner and kept resident in VMEM for every batch tile.
        # (Could add pipeline_mode=pl.Buffered(1) to drop the second buffer,
        # but VMEM is not binding at these sizes.)
        return pl.BlockSpec(shape, lambda i: (0, 0))

    in_specs = [pl.BlockSpec((tile, in_dim), lambda i: (i, 0))]
    flat = []
    for w, b in zip(weights, biases):
        in_specs.append(resident(w.shape))
        in_specs.append(resident(b.shape))
        flat.extend([w, b])

    # Advisory cost estimate for XLA's scheduler.
    sizes = [in_dim] + LAYER_SIZES + [PAD_OUT]
    flops = 2 * B_pad * sum(a * c for a, c in zip(sizes[:-1], sizes[1:]))
    weight_bytes = sum(a * c * 2 + c * 4 for a, c in zip(sizes[:-1], sizes[1:]))
    bytes_accessed = B_pad * in_dim * 4 + weight_bytes + B_pad * PAD_OUT * 2

    out_padded = pl.pallas_call(
        _mlp_kernel,
        out_shape=jax.ShapeDtypeStruct((B_pad, PAD_OUT), jnp.bfloat16),
        grid_spec=pltpu.PrefetchScalarGridSpec(
            num_scalar_prefetch=0,
            grid=grid,
            in_specs=in_specs,
            out_specs=pl.BlockSpec((tile, PAD_OUT), lambda i: (i, 0)),
        ),
        compiler_params=pltpu.CompilerParams(
            dimension_semantics=("parallel",),
            vmem_limit_bytes=VMEM_LIMIT_BYTES,
        ),
        cost_estimate=pl.CostEstimate(
            flops=flops,
            transcendentals=2 * B_pad * PAD_OUT,   # exp + reciprocal
            bytes_accessed=bytes_accessed,
        ),
    )(x, *flat)

    return out_padded[:B, :out_dim].astype(jnp.float32)


def mlp_reference(x, params):
    """Pure-JAX f32 reference matching the PyTorch forward exactly."""
    h = x
    for w, b in params:
        h = jnp.maximum(h @ w + b, 0.0)
    return jax.nn.sigmoid(h)


if __name__ == "__main__":
    key = jax.random.PRNGKey(0)
    k_params, k_x = jax.random.split(key)

    B, in_dim, out_dim = 8, 32, 2
    params = init_mlp_params(k_params, in_dim, out_dim)
    prepared = prepare_params(params, out_dim)      # one-time: pad + bf16 cast
    x = jax.random.normal(k_x, (B, in_dim), jnp.float32)

    y = mlp_forward(x, prepared, out_dim=out_dim)
    y = jax.block_until_ready(y)

    y_ref = mlp_reference(x, params)
    assert y.shape == (B, out_dim), y.shape
    max_err = float(jnp.max(jnp.abs(y - y_ref)))
    # bf16 matmul operands + bf16 output + approx reciprocal -> loose tolerance
    # vs the f32 reference.
    assert max_err < 2e-2, f"mismatch vs reference: max |err| = {max_err}"

    print("KERNEL_OK")
</pallas_src>

<mosaic_0001>
module attributes {stable_mosaic.version = 11 : i64} {
  func.func @_mlp_kernel(%arg0: i32, %arg1: memref<16x32xf32, #tpu.memory_space<vmem>>, %arg2: memref<32x256xbf16, #tpu.memory_space<vmem>>, %arg3: memref<1x256xf32, #tpu.memory_space<vmem>>, %arg4: memref<256x512xbf16, #tpu.memory_space<vmem>>, %arg5: memref<1x512xf32, #tpu.memory_space<vmem>>, %arg6: memref<512x512xbf16, #tpu.memory_space<vmem>>, %arg7: memref<1x512xf32, #tpu.memory_space<vmem>>, %arg8: memref<512x128xbf16, #tpu.memory_space<vmem>>, %arg9: memref<1x128xf32, #tpu.memory_space<vmem>>, %arg10: memref<16x128xbf16, #tpu.memory_space<vmem>>) attributes {dimension_semantics = [#tpu.dimension_semantics<parallel>], iteration_bounds = array<i64: 1>, scalar_prefetch = 0 : i64, scratch_operands = 0 : i64, tpu.core_type = #tpu.core_type<tc>, window_params = [{transform_indices = @transform_0, window_bounds = array<i64: 16, 32>}, {pipeline_mode = #tpu.pipeline_mode<synchronous>, transform_indices = @transform_1, window_bounds = array<i64: 32, 256>}, {pipeline_mode = #tpu.pipeline_mode<synchronous>, transform_indices = @transform_2, window_bounds = array<i64: 1, 256>}, {pipeline_mode = #tpu.pipeline_mode<synchronous>, transform_indices = @transform_3, window_bounds = array<i64: 256, 512>}, {pipeline_mode = #tpu.pipeline_mode<synchronous>, transform_indices = @transform_4, window_bounds = array<i64: 1, 512>}, {pipeline_mode = #tpu.pipeline_mode<synchronous>, transform_indices = @transform_5, window_bounds = array<i64: 512, 512>}, {pipeline_mode = #tpu.pipeline_mode<synchronous>, transform_indices = @transform_6, window_bounds = array<i64: 1, 512>}, {pipeline_mode = #tpu.pipeline_mode<synchronous>, transform_indices = @transform_7, window_bounds = array<i64: 512, 128>}, {pipeline_mode = #tpu.pipeline_mode<synchronous>, transform_indices = @transform_8, window_bounds = array<i64: 1, 128>}, {transform_indices = @transform_9, window_bounds = array<i64: 16, 128>}]} {
    %c0 = arith.constant 0 : index
    %c0_0 = arith.constant 0 : index
    %0 = vector.load %arg1[%c0, %c0_0] : memref<16x32xf32, #tpu.memory_space<vmem>>, vector<16x32xf32>
    %1 = arith.truncf %0 : vector<16x32xf32> to vector<16x32xbf16>
    %c0_1 = arith.constant 0 : index
    %c0_2 = arith.constant 0 : index
    %2 = vector.load %arg2[%c0_1, %c0_2] : memref<32x256xbf16, #tpu.memory_space<vmem>>, vector<32x256xbf16>
    %cst = arith.constant dense<0.000000e+00> : vector<16x256xf32>
    %3 = tpu.matmul %1, %2, %cst {dimension_numbers = #tpu.dot_dimension_numbers<[1], [0], [0], [1], [0, 0, 1, 1], [], []>} : vector<16x32xbf16>, vector<32x256xbf16>, vector<16x256xf32> -> vector<16x256xf32>
    %c0_3 = arith.constant 0 : index
    %c0_4 = arith.constant 0 : index
    %4 = vector.load %arg3[%c0_3, %c0_4] : memref<1x256xf32, #tpu.memory_space<vmem>>, vector<1x256xf32>
    %5 = vector.broadcast %4 : vector<1x256xf32> to vector<16x256xf32>
    %6 = arith.addf %3, %5 : vector<16x256xf32>
    %cst_5 = arith.constant 0.000000e+00 : f32
    %7 = vector.broadcast %cst_5 : f32 to vector<16x256xf32>
    %8 = arith.maximumf %6, %7 : vector<16x256xf32>
    %9 = arith.truncf %8 : vector<16x256xf32> to vector<16x256xbf16>
    %c0_6 = arith.constant 0 : index
    %c0_7 = arith.constant 0 : index
    %10 = vector.load %arg4[%c0_6, %c0_7] : memref<256x512xbf16, #tpu.memory_space<vmem>>, vector<256x512xbf16>
    %cst_8 = arith.constant dense<0.000000e+00> : vector<16x512xf32>
    %11 = tpu.matmul %9, %10, %cst_8 {dimension_numbers = #tpu.dot_dimension_numbers<[1], [0], [0], [1], [0, 0, 1, 1], [], []>} : vector<16x256xbf16>, vector<256x512xbf16>, vector<16x512xf32> -> vector<16x512xf32>
    %c0_9 = arith.constant 0 : index
    %c0_10 = arith.constant 0 : index
    %12 = vector.load %arg5[%c0_9, %c0_10] : memref<1x512xf32, #tpu.memory_space<vmem>>, vector<1x512xf32>
    %13 = vector.broadcast %12 : vector<1x512xf32> to vector<16x512xf32>
    %14 = arith.addf %11, %13 : vector<16x512xf32>
    %cst_11 = arith.constant 0.000000e+00 : f32
    %15 = vector.broadcast %cst_11 : f32 to vector<16x512xf32>
    %16 = arith.maximumf %14, %15 : vector<16x512xf32>
    %17 = arith.truncf %16 : vector<16x512xf32> to vector<16x512xbf16>
    %c0_12 = arith.constant 0 : index
    %c0_13 = arith.constant 0 : index
    %18 = vector.load %arg6[%c0_12, %c0_13] : memref<512x512xbf16, #tpu.memory_space<vmem>>, vector<512x512xbf16>
    %cst_14 = arith.constant dense<0.000000e+00> : vector<16x512xf32>
    %19 = tpu.matmul %17, %18, %cst_14 {dimension_numbers = #tpu.dot_dimension_numbers<[1], [0], [0], [1], [0, 0, 1, 1], [], []>} : vector<16x512xbf16>, vector<512x512xbf16>, vector<16x512xf32> -> vector<16x512xf32>
    %c0_15 = arith.constant 0 : index
    %c0_16 = arith.constant 0 : index
    %20 = vector.load %arg7[%c0_15, %c0_16] : memref<1x512xf32, #tpu.memory_space<vmem>>, vector<1x512xf32>
    %21 = vector.broadcast %20 : vector<1x512xf32> to vector<16x512xf32>
    %22 = arith.addf %19, %21 : vector<16x512xf32>
    %cst_17 = arith.constant 0.000000e+00 : f32
    %23 = vector.broadcast %cst_17 : f32 to vector<16x512xf32>
    %24 = arith.maximumf %22, %23 : vector<16x512xf32>
    %25 = arith.truncf %24 : vector<16x512xf32> to vector<16x512xbf16>
    %c0_18 = arith.constant 0 : index
    %c0_19 = arith.constant 0 : index
    %26 = vector.load %arg8[%c0_18, %c0_19] : memref<512x128xbf16, #tpu.memory_space<vmem>>, vector<512x128xbf16>
    %cst_20 = arith.constant dense<0.000000e+00> : vector<16x128xf32>
    %27 = tpu.matmul %25, %26, %cst_20 {dimension_numbers = #tpu.dot_dimension_numbers<[1], [0], [0], [1], [0, 0, 1, 1], [], []>} : vector<16x512xbf16>, vector<512x128xbf16>, vector<16x128xf32> -> vector<16x128xf32>
    %c0_21 = arith.constant 0 : index
    %c0_22 = arith.constant 0 : index
    %28 = vector.load %arg9[%c0_21, %c0_22] : memref<1x128xf32, #tpu.memory_space<vmem>>, vector<1x128xf32>
    %29 = vector.broadcast %28 : vector<1x128xf32> to vector<16x128xf32>
    %30 = arith.addf %27, %29 : vector<16x128xf32>
    %cst_23 = arith.constant 0.000000e+00 : f32
    %31 = vector.broadcast %cst_23 : f32 to vector<16x128xf32>
    %32 = arith.maximumf %30, %31 : vector<16x128xf32>
    %cst_24 = arith.constant 0.000000e+00 : f32
    %33 = vector.broadcast %cst_24 : f32 to vector<16x128xf32>
    %34 = arith.subf %33, %32 : vector<16x128xf32>
    %35 = math.exp %34 : vector<16x128xf32>
    %cst_25 = arith.constant 1.000000e+00 : f32
    %36 = vector.broadcast %cst_25 : f32 to vector<16x128xf32>
    %37 = arith.addf %36, %35 : vector<16x128xf32>
    %38 = tpu.reciprocal %37 {approx = true} : vector<16x128xf32> -> vector<16x128xf32>
    %39 = arith.truncf %38 : vector<16x128xf32> to vector<16x128xbf16>
    %c0_26 = arith.constant 0 : index
    %c0_27 = arith.constant 0 : index
    %40 = vector.load %arg10[%c0_26, %c0_27] : memref<16x128xbf16, #tpu.memory_space<vmem>>, vector<16x128xbf16>
    tpu.vector_store %arg10[%c0_26, %c0_27], %39 {strides = array<i32>} : memref<16x128xbf16, #tpu.memory_space<vmem>>, vector<16x128xbf16>,
    return
  }
  func.func @transform_0(%arg0: i32) -> (i32, i32) {
    %c0_i32 = arith.constant 0 : i32
    %c0_i32_0 = arith.constant 0 : i32
    return %arg0, %c0_i32 : i32, i32
  }
  func.func @transform_1(%arg0: i32) -> (i32, i32) {
    %c0_i32 = arith.constant 0 : i32
    %c0_i32_0 = arith.constant 0 : i32
    %c0_i32_1 = arith.constant 0 : i32
    return %c0_i32, %c0_i32_0 : i32, i32
  }
  func.func @transform_2(%arg0: i32) -> (i32, i32) {
    %c0_i32 = arith.constant 0 : i32
    %c0_i32_0 = arith.constant 0 : i32
    %c0_i32_1 = arith.constant 0 : i32
    return %c0_i32, %c0_i32_0 : i32, i32
  }
  func.func @transform_3(%arg0: i32) -> (i32, i32) {
    %c0_i32 = arith.constant 0 : i32
    %c0_i32_0 = arith.constant 0 : i32
    %c0_i32_1 = arith.constant 0 : i32
    return %c0_i32, %c0_i32_0 : i32, i32
  }
  func.func @transform_4(%arg0: i32) -> (i32, i32) {
    %c0_i32 = arith.constant 0 : i32
    %c0_i32_0 = arith.constant 0 : i32
    %c0_i32_1 = arith.constant 0 : i32
    return %c0_i32, %c0_i32_0 : i32, i32
  }
  func.func @transform_5(%arg0: i32) -> (i32, i32) {
    %c0_i32 = arith.constant 0 : i32
    %c0_i32_0 = arith.constant 0 : i32
    %c0_i32_1 = arith.constant 0 : i32
    return %c0_i32, %c0_i32_0 : i32, i32
  }
  func.func @transform_6(%arg0: i32) -> (i32, i32) {
    %c0_i32 = arith.constant 0 : i32
    %c0_i32_0 = arith.constant 0 : i32
    %c0_i32_1 = arith.constant 0 : i32
    return %c0_i32, %c0_i32_0 : i32, i32
  }
  func.func @transform_7(%arg0: i32) -> (i32, i32) {
    %c0_i32 = arith.constant 0 : i32
    %c0_i32_0 = arith.constant 0 : i32
    %c0_i32_1 = arith.constant 0 : i32
    return %c0_i32, %c0_i32_0 : i32, i32
  }
  func.func @transform_8(%arg0: i32) -> (i32, i32) {
    %c0_i32 = arith.constant 0 : i32
    %c0_i32_0 = arith.constant 0 : i32
    %c0_i32_1 = arith.constant 0 : i32
    return %c0_i32, %c0_i32_0 : i32, i32
  }
  func.func @transform_9(%arg0: i32) -> (i32, i32) {
    %c0_i32 = arith.constant 0 : i32
    %c0_i32_0 = arith.constant 0 : i32
    return %arg0, %c0_i32 : i32, i32
  }
}

</mosaic_0001>

<llo_original>
// kernel: mlp_forward.1
$region0: #{mlp_forward.1}
  #allocation0 [shape = 'u32[]', space=smem, size = 0x4, offset = 0x4, fixed_abs, tag = 'smem constant byte address 0x4 - core index']
  #allocation1 [shape = 'u32[72,128]{1,0:T(1,128)}', space=vmem, size = 0x9000, scoped, tag = 'internal scratch']
  %s0 = inlined_call_operand.vmem [shape: f32[16,32], index: 0, kind: input, shape index: {}]
  %s1 = inlined_call_operand.hbm [shape: bf16[32,256], index: 1, kind: input, shape index: {}]
  %s2 = inlined_call_operand.vmem [shape: f32[1,256], index: 2, kind: input, shape index: {}]
  %s3 = inlined_call_operand.hbm [shape: bf16[256,512], index: 3, kind: input, shape index: {}]
  %s4 = inlined_call_operand.vmem [shape: f32[1,512], index: 4, kind: input, shape index: {}]
  %s5 = inlined_call_operand.hbm [shape: bf16[512,512], index: 5, kind: input, shape index: {}]
  %s6 = inlined_call_operand.vmem [shape: f32[1,512], index: 6, kind: input, shape index: {}]
  %s7 = inlined_call_operand.hbm [shape: bf16[512,128], index: 7, kind: input, shape index: {}]
  %s8 = inlined_call_operand.vmem [shape: f32[1,128], index: 8, kind: input, shape index: {}]
  %s9 = inlined_call_operand.vmem [shape: bf16[16,128], index: 9, kind: output, shape index: {}]
  %s10 = sld [smem:[#allocation0]]
  $region62: #{mlp_forward.1} parent=0
    _
  %s12 = ssub.s32 1, %s10
  %s13 = scalar_select 0, %s12, %s10
  $region1: #{mlp_forward.1} parent=0
    #allocation2 [shape = 'u8[16384]{0}', space=vmem, size = 0x4000, scoped, tag = 'input window, operand 1, single buffered']
    #allocation3 [shape = 's32[1]{0}', space=sflag, size = 0x4, scoped, tag = 'scoped memory for mlp_forward.1']
    #allocation4 [shape = 'u8[262144]{0}', space=vmem, size = 0x40000, scoped, tag = 'input window, operand 3, single buffered']
    #allocation5 [shape = 's32[1]{0}', space=sflag, size = 0x4, scoped, tag = 'scoped memory for mlp_forward.1']
    #allocation6 [shape = 'u8[524288]{0}', space=vmem, size = 0x80000, scoped, tag = 'input window, operand 5, single buffered']
    #allocation7 [shape = 'u8[131072]{0}', space=vmem, size = 0x20000, scoped, tag = 'input window, operand 7, single buffered']
    #allocation8 [shape = 's32[1]{0}', space=sflag, size = 0x4, scoped, tag = 'scoped memory for mlp_forward.1']
    %14 = vsyncpa [#allocation3], 0
    %15 = vsyncpa [#allocation5], 0
    %16 = vsyncpa [#allocation8], 0
    // Predicated region
    $region2: #{mlp_forward.1} parent=1 // pred_check
      _
    $region3: #{mlp_forward.1} parent=1 // pred_check_branch
      %18 = sbr.rel (0) target = $region5
    $region4: #{mlp_forward.1} parent=1 // pred_region
      _
    $region5: #{mlp_forward.1} parent=1 // pred_fallthru
      _
    // Predicated region
    $region6: #{mlp_forward.1} parent=1 // pred_check
      _
    $region7: #{mlp_forward.1} parent=1 // pred_check_branch
      %20 = sbr.rel (0) target = $region9
    $region8: #{mlp_forward.1} parent=1 // pred_region
      %22 = vsyncadd [#allocation3], 0
      %s23 = sshll.u32 %s1, 4
      %s24 = int_to_ptr.hbm [resolvable:$true] %s23
      %s25 = sshll.u32 [#allocation2], 4
      %s26 = int_to_ptr.vmem [resolvable:$true] %s25
      %31 = dma.hbm_to_vmem [thread:$0]  %s24, 512, %s26, [#allocation3], 128, 128, 8
    $region9: #{mlp_forward.1} parent=1 // pred_fallthru
      _
    // Predicated region
    $region10: #{mlp_forward.1} parent=1 // pred_check
      _
    $region11: #{mlp_forward.1} parent=1 // pred_check_branch
      %33 = sbr.rel (0) target = $region13
    $region12: #{mlp_forward.1} parent=1 // pred_region
      _
    $region13: #{mlp_forward.1} parent=1 // pred_fallthru
      _
    // Predicated region
    $region14: #{mlp_forward.1} parent=1 // pred_check
      _
    $region15: #{mlp_forward.1} parent=1 // pred_check_branch
      %35 = sbr.rel (0) target = $region17
    $region16: #{mlp_forward.1} parent=1 // pred_region
      %37 = vsyncadd [#allocation5], 0
      %s38 = sshll.u32 %s3, 4
      %s39 = int_to_ptr.hbm [resolvable:$true] %s38
      %s40 = sshll.u32 [#allocation4], 4
      %s41 = int_to_ptr.vmem [resolvable:$true] %s40
      %46 = dma.hbm_to_vmem [thread:$0]  %s39, 8192, %s41, [#allocation5], 256, 256, 16
    $region17: #{mlp_forward.1} parent=1 // pred_fallthru
      _
    // Predicated region
    $region18: #{mlp_forward.1} parent=1 // pred_check
      _
    $region19: #{mlp_forward.1} parent=1 // pred_check_branch
      %48 = sbr.rel (0) target = $region21
    $region20: #{mlp_forward.1} parent=1 // pred_region
      _
    $region21: #{mlp_forward.1} parent=1 // pred_fallthru
      _
    // Predicated region
    $region22: #{mlp_forward.1} parent=1 // pred_check
      _
    $region23: #{mlp_forward.1} parent=1 // pred_check_branch
      %50 = sbr.rel (0) target = $region25
    $region24: #{mlp_forward.1} parent=1 // pred_region
      %52 = vsyncadd [#allocation5], 0
      %s53 = sshll.u32 %s5, 4
      %s54 = int_to_ptr.hbm [resolvable:$true] %s53
      %s55 = sshll.u32 [#allocation6], 4
      %s56 = int_to_ptr.vmem [resolvable:$true] %s55
      %61 = dma.hbm_to_vmem [thread:$0]  %s54, 16384, %s56, [#allocation5], 256, 256, 16
    $region25: #{mlp_forward.1} parent=1 // pred_fallthru
      _
    // Predicated region
    $region26: #{mlp_forward.1} parent=1 // pred_check
      _
    $region27: #{mlp_forward.1} parent=1 // pred_check_branch
      %63 = sbr.rel (0) target = $region29
    $region28: #{mlp_forward.1} parent=1 // pred_region
      _
    $region29: #{mlp_forward.1} parent=1 // pred_fallthru
      _
    // Predicated region
    $region30: #{mlp_forward.1} parent=1 // pred_check
      _
    $region31: #{mlp_forward.1} parent=1 // pred_check_branch
      %65 = sbr.rel (0) target = $region33
    $region32: #{mlp_forward.1} parent=1 // pred_region
      %67 = vsyncadd [#allocation8], 0
      %s68 = sshll.u32 %s7, 4
      %s69 = int_to_ptr.hbm [resolvable:$true] %s68
      %s70 = sshll.u32 [#allocation7], 4
      %s71 = int_to_ptr.vmem [resolvable:$true] %s70
      %76 = dma.hbm_to_vmem [thread:$0]  %s69, 4096, %s71, [#allocation8], 64, 64, 4
    $region33: #{mlp_forward.1} parent=1 // pred_fallthru
      _
    // Predicated region
    $region34: #{mlp_forward.1} parent=1 // pred_check
      _
    $region35: #{mlp_forward.1} parent=1 // pred_check_branch
      %78 = sbr.rel (0) target = $region37
    $region36: #{mlp_forward.1} parent=1 // pred_region
      _
    $region37: #{mlp_forward.1} parent=1 // pred_fallthru
      _
    // Predicated region
    $region38: #{mlp_forward.1} parent=1 // pred_check
      _
    $region39: #{mlp_forward.1} parent=1 // pred_check_branch
      %80 = sbr.rel (0) target = $region41
    $region40: #{mlp_forward.1} parent=1 // pred_region
      %82 = dma.done [#allocation3], 512
    $region41: #{mlp_forward.1} parent=1 // pred_fallthru
      _
    // Predicated region
    $region42: #{mlp_forward.1} parent=1 // pred_check
      _
    $region43: #{mlp_forward.1} parent=1 // pred_check_branch
      %84 = sbr.rel (0) target = $region45
    $region44: #{mlp_forward.1} parent=1 // pred_region
      %86 = dma.done [#allocation5], 8192
    $region45: #{mlp_forward.1} parent=1 // pred_fallthru
      _
    // Predicated region
    $region46: #{mlp_forward.1} parent=1 // pred_check
      _
    $region47: #{mlp_forward.1} parent=1 // pred_check_branch
      %88 = sbr.rel (0) target = $region49
    $region48: #{mlp_forward.1} parent=1 // pred_region
      %90 = dma.done [#allocation5], 16384
    $region49: #{mlp_forward.1} parent=1 // pred_fallthru
      _
    // Predicated region
    $region50: #{mlp_forward.1} parent=1 // pred_check
      _
    $region51: #{mlp_forward.1} parent=1 // pred_check_branch
      %92 = sbr.rel (0) target = $region53
    $region52: #{mlp_forward.1} parent=1 // pred_region
      %94 = dma.done [#allocation8], 4096
    $region53: #{mlp_forward.1} parent=1 // pred_fallthru
      _
    %v96 = vld [vmem:[%s0] sm:$0xff]
    %v97 = vld [vmem:[%s0 + $0x8] sm:$0xff]
    %v98 = vpack.c.bf16 %v97, %v96
    %v99 = vld [vmem:[#allocation2] sm:$0xff]
    %v100 = vld [vmem:[#allocation2 + $0x8] sm:$0xff]
    %v101 = vld [vmem:[#allocation2 + $0x10] sm:$0xff]
    %v102 = vld [vmem:[#allocation2 + $0x18] sm:$0xff]
    %v103 = vld [vmem:[%s2] sm:$0x3]
    %v105 = vperm.slane %v103, 0
    %v106 = vperm.slane %v103, 1
    %v113 = vunpack.c.l.b16 %v99
    %v114 = vunpack.c.h.b16 %v99
    %v115 = vunpack.c.l.b16 %v100
    %v116 = vunpack.c.h.b16 %v100
    %v117 = vunpack.c.l.b16 %v101
    %v118 = vunpack.c.h.b16 %v101
    %v119 = vunpack.c.l.b16 %v102
    %v120 = vunpack.c.h.b16 %v102
    %v121 = vpack.c.b16 %v115, %v113
    %v122 = vpack.c.b16 %v116, %v114
    %v123 = vpack.c.b16 %v119, %v117
    %v124 = vpack.c.b16 %v120, %v118
    %vm129 = vcmask 261120
    %v131 = vsel %vm129, %v98, 0
    %133 = vmatpush.bf16.msra.mxu0 0
    %134 = vmatpush.bf16.msra.mxu0 0
    %135 = vmatpush.bf16.msra.mxu0 0
    %136 = vmatpush.bf16.msra.mxu0 0
    %137 = vmatpush.bf16.msra.mxu0 0
    %138 = vmatpush.bf16.msra.mxu0 0
    %139 = vmatpush.bf16.msra.mxu0 %v123
    %140 = vmatpush.bf16.msra.mxu0 %v121
    %141 = vmatmul.bf16.gmra.mxu0 %v131
    %v142 = vpop.f32.mrf.mxu0
    %v143 = vadd.f32 %v105, %v142
    %v144 = vpop.f32.mrf.mxu0
    %v145 = vadd.f32 %v105, %v144
    %146 = vdwg.mxu0
    %147 = vmatpush.bf16.msra.mxu0 0
    %148 = vmatpush.bf16.msra.mxu0 0
    %149 = vmatpush.bf16.msra.mxu0 0
    %150 = vmatpush.bf16.msra.mxu0 0
    %151 = vmatpush.bf16.msra.mxu0 0
    %152 = vmatpush.bf16.msra.mxu0 0
    %153 = vmatpush.bf16.msra.mxu0 %v124
    %154 = vmatpush.bf16.msra.mxu0 %v122
    %155 = vmatmul.bf16.gmra.mxu0 %v131
    %v156 = vpop.f32.mrf.mxu0
    %v157 = vadd.f32 %v106, %v156
    %v158 = vpop.f32.mrf.mxu0
    %v159 = vadd.f32 %v106, %v158
    %160 = vdwg.mxu0
    %v161 = vmax.f32 %v143, 0.0
    %v162 = vmax.f32 %v157, 0.0
    %v163 = vmax.f32 %v145, 0.0
    %v164 = vmax.f32 %v159, 0.0
    %v165 = vpack.c.bf16 %v163, %v161
    %v166 = vpack.c.bf16 %v164, %v162
    %v167 = vld [vmem:[#allocation4] sm:$0xff]
    %v168 = vld [vmem:[#allocation4 + $0x8] sm:$0xff]
    %v169 = vld [vmem:[#allocation4 + $0x10] sm:$0xff]
    %v170 = vld [vmem:[#allocation4 + $0x18] sm:$0xff]
    %v171 = vld [vmem:[#allocation4 + $0x20] sm:$0xff]
    %v172 = vld [vmem:[#allocation4 + $0x28] sm:$0xff]
    %v173 = vld [vmem:[#allocation4 + $0x30] sm:$0xff]
    %v174 = vld [vmem:[#allocation4 + $0x38] sm:$0xff]
    %v175 = vld [vmem:[#allocation4 + $0x40] sm:$0xff]
    %v176 = vld [vmem:[#allocation4 + $0x48] sm:$0xff]
    %v177 = vld [vmem:[#allocation4 + $0x50] sm:$0xff]
    %v178 = vld [vmem:[#allocation4 + $0x58] sm:$0xff]
    %v179 = vld [vmem:[#allocation4 + $0x60] sm:$0xff]
    %v180 = vld [vmem:[#allocation4 + $0x68] sm:$0xff]
    %v181 = vld [vmem:[#allocation4 + $0x70] sm:$0xff]
    %v182 = vld [vmem:[#allocation4 + $0x78] sm:$0xff]
    %v183 = vld [vmem:[#allocation4 + $0x80] sm:$0xff]
    %v184 = vld [vmem:[#allocation4 + $0x88] sm:$0xff]
    %v185 = vld [vmem:[#allocation4 + $0x90] sm:$0xff]
    %v186 = vld [vmem:[#allocation4 + $0x98] sm:$0xff]
    %v187 = vld [vmem:[#allocation4 + $0xa0] sm:$0xff]
    %v188 = vld [vmem:[#allocation4 + $0xa8] sm:$0xff]
    %v189 = vld [vmem:[#allocation4 + $0xb0] sm:$0xff]
    %v190 = vld [vmem:[#allocation4 + $0xb8] sm:$0xff]
    %v191 = vld [vmem:[#allocation4 + $0xc0] sm:$0xff]
    %v192 = vld [vmem:[#allocation4 + $0xc8] sm:$0xff]
    %v193 = vld [vmem:[#allocation4 + $0xd0] sm:$0xff]
    %v194 = vld [vmem:[#allocation4 + $0xd8] sm:$0xff]
    %v195 = vld [vmem:[#allocation4 + $0xe0] sm:$0xff]
    %v196 = vld [vmem:[#allocation4 + $0xe8] sm:$0xff]
    %v197 = vld [vmem:[#allocation4 + $0xf0] sm:$0xff]
    %v198 = vld [vmem:[#allocation4 + $0xf8] sm:$0xff]
    %v199 = vld [vmem:[#allocation4 + $0x100] sm:$0xff]
    %v200 = vld [vmem:[#allocation4 + $0x108] sm:$0xff]
    %v201 = vld [vmem:[#allocation4 + $0x110] sm:$0xff]
    %v202 = vld [vmem:[#allocation4 + $0x118] sm:$0xff]
    %v203 = vld [vmem:[#allocation4 + $0x120] sm:$0xff]
    %v204 = vld [vmem:[#allocation4 + $0x128] sm:$0xff]
    %v205 = vld [vmem:[#allocation4 + $0x130] sm:$0xff]
    %v206 = vld [vmem:[#allocation4 + $0x138] sm:$0xff]
    %v207 = vld [vmem:[#allocation4 + $0x140] sm:$0xff]
    %v208 = vld [vmem:[#allocation4 + $0x148] sm:$0xff]
    %v209 = vld [vmem:[#allocation4 + $0x150] sm:$0xff]
    %v210 = vld [vmem:[#allocation4 + $0x158] sm:$0xff]
    %v211 = vld [vmem:[#allocation4 + $0x160] sm:$0xff]
    %v212 = vld [vmem:[#allocation4 + $0x168] sm:$0xff]
    %v213 = vld [vmem:[#allocation4 + $0x170] sm:$0xff]
    %v214 = vld [vmem:[#allocation4 + $0x178] sm:$0xff]
    %v215 = vld [vmem:[#allocation4 + $0x180] sm:$0xff]
    %v216 = vld [vmem:[#allocation4 + $0x188] sm:$0xff]
    %v217 = vld [vmem:[#allocation4 + $0x190] sm:$0xff]
    %v218 = vld [vmem:[#allocation4 + $0x198] sm:$0xff]
    %v219 = vld [vmem:[#allocation4 + $0x1a0] sm:$0xff]
    %v220 = vld [vmem:[#allocation4 + $0x1a8] sm:$0xff]
    %v221 = vld [vmem:[#allocation4 + $0x1b0] sm:$0xff]
    %v222 = vld [vmem:[#allocation4 + $0x1b8] sm:$0xff]
    %v223 = vld [vmem:[#allocation4 + $0x1c0] sm:$0xff]
    %v224 = vld [vmem:[#allocation4 + $0x1c8] sm:$0xff]
    %v225 = vld [vmem:[#allocation4 + $0x1d0] sm:$0xff]
    %v226 = vld [vmem:[#allocation4 + $0x1d8] sm:$0xff]
    %v227 = vld [vmem:[#allocation4 + $0x1e0] sm:$0xff]
    %v228 = vld [vmem:[#allocation4 + $0x1e8] sm:$0xff]
    %v229 = vld [vmem:[#allocation4 + $0x1f0] sm:$0xff]
    %v230 = vld [vmem:[#allocation4 + $0x1f8] sm:$0xff]
    %v231 = vld [vmem:[%s4] sm:$0xf]
    %v233 = vperm.slane %v231, 0
    %v234 = vperm.slane %v231, 1
    %v235 = vperm.slane %v231, 2
    %v236 = vperm.slane %v231, 3
    %v305 = vunpack.c.l.b16 %v167
    %v306 = vunpack.c.h.b16 %v167
    %v307 = vunpack.c.l.b16 %v168
    %v308 = vunpack.c.h.b16 %v168
    %v309 = vunpack.c.l.b16 %v169
    %v310 = vunpack.c.h.b16 %v169
    %v311 = vunpack.c.l.b16 %v170
    %v312 = vunpack.c.h.b16 %v170
    %v313 = vunpack.c.l.b16 %v171
    %v314 = vunpack.c.h.b16 %v171
    %v315 = vunpack.c.l.b16 %v172
    %v316 = vunpack.c.h.b16 %v172
    %v317 = vunpack.c.l.b16 %v173
    %v318 = vunpack.c.h.b16 %v173
    %v319 = vunpack.c.l.b16 %v174
    %v320 = vunpack.c.h.b16 %v174
    %v321 = vunpack.c.l.b16 %v175
    %v322 = vunpack.c.h.b16 %v175
    %v323 = vunpack.c.l.b16 %v176
    %v324 = vunpack.c.h.b16 %v176
    %v325 = vunpack.c.l.b16 %v177
    %v326 = vunpack.c.h.b16 %v177
    %v327 = vunpack.c.l.b16 %v178
    %v328 = vunpack.c.h.b16 %v178
    %v329 = vunpack.c.l.b16 %v179
    %v330 = vunpack.c.h.b16 %v179
    %v331 = vunpack.c.l.b16 %v180
    %v332 = vunpack.c.h.b16 %v180
    %v333 = vunpack.c.l.b16 %v181
    %v334 = vunpack.c.h.b16 %v181
    %v335 = vunpack.c.l.b16 %v182
    %v336 = vunpack.c.h.b16 %v182
    %v337 = vunpack.c.l.b16 %v183
    %v338 = vunpack.c.h.b16 %v183
    %v339 = vunpack.c.l.b16 %v184
    %v340 = vunpack.c.h.b16 %v184
    %v341 = vunpack.c.l.b16 %v185
    %v342 = vunpack.c.h.b16 %v185
    %v343 = vunpack.c.l.b16 %v186
    %v344 = vunpack.c.h.b16 %v186
    %v345 = vunpack.c.l.b16 %v187
    %v346 = vunpack.c.h.b16 %v187
    %v347 = vunpack.c.l.b16 %v188
    %v348 = vunpack.c.h.b16 %v188
    %v349 = vunpack.c.l.b16 %v189
    %v350 = vunpack.c.h.b16 %v189
    %v351 = vunpack.c.l.b16 %v190
    %v352 = vunpack.c.h.b16 %v190
    %v353 = vunpack.c.l.b16 %v191
    %v354 = vunpack.c.h.b16 %v191
    %v355 = vunpack.c.l.b16 %v192
    %v356 = vunpack.c.h.b16 %v192
    %v357 = vunpack.c.l.b16 %v193
    %v358 = vunpack.c.h.b16 %v193
    %v359 = vunpack.c.l.b16 %v194
    %v360 = vunpack.c.h.b16 %v194
    %v361 = vunpack.c.l.b16 %v195
    %v362 = vunpack.c.h.b16 %v195
    %v363 = vunpack.c.l.b16 %v196
    %v364 = vunpack.c.h.b16 %v196
    %v365 = vunpack.c.l.b16 %v197
    %v366 = vunpack.c.h.b16 %v197
    %v367 = vunpack.c.l.b16 %v198
    %v368 = vunpack.c.h.b16 %v198
    %v369 = vunpack.c.l.b16 %v199
    %v370 = vunpack.c.h.b16 %v199
    %v371 = vunpack.c.l.b16 %v200
    %v372 = vunpack.c.h.b16 %v200
    %v373 = vunpack.c.l.b16 %v201
    %v374 = vunpack.c.h.b16 %v201
    %v375 = vunpack.c.l.b16 %v202
    %v376 = vunpack.c.h.b16 %v202
    %v377 = vunpack.c.l.b16 %v203
    %v378 = vunpack.c.h.b16 %v203
    %v379 = vunpack.c.l.b16 %v204
    %v380 = vunpack.c.h.b16 %v204
    %v381 = vunpack.c.l.b16 %v205
    %v382 = vunpack.c.h.b16 %v205
    %v383 = vunpack.c.l.b16 %v206
    %v384 = vunpack.c.h.b16 %v206
    %v385 = vunpack.c.l.b16 %v207
    %v386 = vunpack.c.h.b16 %v207
    %v387 = vunpack.c.l.b16 %v208
    %v388 = vunpack.c.h.b16 %v208
    %v389 = vunpack.c.l.b16 %v209
    %v390 = vunpack.c.h.b16 %v209
    %v391 = vunpack.c.l.b16 %v210
    %v392 = vunpack.c.h.b16 %v210
    %v393 = vunpack.c.l.b16 %v211
    %v394 = vunpack.c.h.b16 %v211
    %v395 = vunpack.c.l.b16 %v212
    %v396 = vunpack.c.h.b16 %v212
    %v397 = vunpack.c.l.b16 %v213
    %v398 = vunpack.c.h.b16 %v213
    %v399 = vunpack.c.l.b16 %v214
    %v400 = vunpack.c.h.b16 %v214
    %v401 = vunpack.c.l.b16 %v215
    %v402 = vunpack.c.h.b16 %v215
    %v403 = vunpack.c.l.b16 %v216
    %v404 = vunpack.c.h.b16 %v216
    %v405 = vunpack.c.l.b16 %v217
    %v406 = vunpack.c.h.b16 %v217
    %v407 = vunpack.c.l.b16 %v218
    %v408 = vunpack.c.h.b16 %v218
    %v409 = vunpack.c.l.b16 %v219
    %v410 = vunpack.c.h.b16 %v219
    %v411 = vunpack.c.l.b16 %v220
    %v412 = vunpack.c.h.b16 %v220
    %v413 = vunpack.c.l.b16 %v221
    %v414 = vunpack.c.h.b16 %v221
    %v415 = vunpack.c.l.b16 %v222
    %v416 = vunpack.c.h.b16 %v222
    %v417 = vunpack.c.l.b16 %v223
    %v418 = vunpack.c.h.b16 %v223
    %v419 = vunpack.c.l.b16 %v224
    %v420 = vunpack.c.h.b16 %v224
    %v421 = vunpack.c.l.b16 %v225
    %v422 = vunpack.c.h.b16 %v225
    %v423 = vunpack.c.l.b16 %v226
    %v424 = vunpack.c.h.b16 %v226
    %v425 = vunpack.c.l.b16 %v227
    %v426 = vunpack.c.h.b16 %v227
    %v427 = vunpack.c.l.b16 %v228
    %v428 = vunpack.c.h.b16 %v228
    %v429 = vunpack.c.l.b16 %v229
    %v430 = vunpack.c.h.b16 %v229
    %v431 = vunpack.c.l.b16 %v230
    %v432 = vunpack.c.h.b16 %v230
    %v433 = vpack.c.b16 %v309, %v305
    %v434 = vpack.c.b16 %v310, %v306
    %v435 = vpack.c.b16 %v311, %v307
    %v436 = vpack.c.b16 %v312, %v308
    %v437 = vpack.c.b16 %v317, %v313
    %v438 = vpack.c.b16 %v318, %v314
    %v439 = vpack.c.b16 %v319, %v315
    %v440 = vpack.c.b16 %v320, %v316
    %v441 = vpack.c.b16 %v325, %v321
    %v442 = vpack.c.b16 %v326, %v322
    %v443 = vpack.c.b16 %v327, %v323
    %v444 = vpack.c.b16 %v328, %v324
    %v445 = vpack.c.b16 %v333, %v329
    %v446 = vpack.c.b16 %v334, %v330
    %v447 = vpack.c.b16 %v335, %v331
    %v448 = vpack.c.b16 %v336, %v332
    %v449 = vpack.c.b16 %v341, %v337
    %v450 = vpack.c.b16 %v342, %v338
    %v451 = vpack.c.b16 %v343, %v339
    %v452 = vpack.c.b16 %v344, %v340
    %v453 = vpack.c.b16 %v349, %v345
    %v454 = vpack.c.b16 %v350, %v346
    %v455 = vpack.c.b16 %v351, %v347
    %v456 = vpack.c.b16 %v352, %v348
    %v457 = vpack.c.b16 %v357, %v353
    %v458 = vpack.c.b16 %v358, %v354
    %v459 = vpack.c.b16 %v359, %v355
    %v460 = vpack.c.b16 %v360, %v356
    %v461 = vpack.c.b16 %v365, %v361
    %v462 = vpack.c.b16 %v366, %v362
    %v463 = vpack.c.b16 %v367, %v363
    %v464 = vpack.c.b16 %v368, %v364
    %v465 = vpack.c.b16 %v373, %v369
    %v466 = vpack.c.b16 %v374, %v370
    %v467 = vpack.c.b16 %v375, %v371
    %v468 = vpack.c.b16 %v376, %v372
    %v469 = vpack.c.b16 %v381, %v377
    %v470 = vpack.c.b16 %v382, %v378
    %v471 = vpack.c.b16 %v383, %v379
    %v472 = vpack.c.b16 %v384, %v380
    %v473 = vpack.c.b16 %v389, %v385
    %v474 = vpack.c.b16 %v390, %v386
    %v475 = vpack.c.b16 %v391, %v387
    %v476 = vpack.c.b16 %v392, %v388
    %v477 = vpack.c.b16 %v397, %v393
    %v478 = vpack.c.b16 %v398, %v394
    %v479 = vpack.c.b16 %v399, %v395
    %v480 = vpack.c.b16 %v400, %v396
    %v481 = vpack.c.b16 %v405, %v401
    %v482 = vpack.c.b16 %v406, %v402
    %v483 = vpack.c.b16 %v407, %v403
    %v484 = vpack.c.b16 %v408, %v404
    %v485 = vpack.c.b16 %v413, %v409
    %v486 = vpack.c.b16 %v414, %v410
    %v487 = vpack.c.b16 %v415, %v411
    %v488 = vpack.c.b16 %v416, %v412
    %v489 = vpack.c.b16 %v421, %v417
    %v490 = vpack.c.b16 %v422, %v418
    %v491 = vpack.c.b16 %v423, %v419
    %v492 = vpack.c.b16 %v424, %v420
    %v493 = vpack.c.b16 %v429, %v425
    %v494 = vpack.c.b16 %v430, %v426
    %v495 = vpack.c.b16 %v431, %v427
    %v496 = vpack.c.b16 %v432, %v428
    %561 = vmatpush.bf16.msra.mxu0 %v461
    %562 = vmatpush.bf16.msra.mxu0 %v457
    %563 = vmatpush.bf16.msra.mxu0 %v453
    %564 = vmatpush.bf16.msra.mxu0 %v449
    %565 = vmatpush.bf16.msra.mxu0 %v445
    %566 = vmatpush.bf16.msra.mxu0 %v441
    %567 = vmatpush.bf16.msra.mxu0 %v437
    %568 = vmatpush.bf16.msra.mxu0 %v433
    %569 = vmatmul.bf16.gmra.mxu0 %v165
    %v570 = vpop.f32.mrf.mxu0
    %v571 = vadd.f32 %v233, %v570
    %v572 = vpop.f32.mrf.mxu0
    %v573 = vadd.f32 %v233, %v572
    %574 = vdwg.mxu0
    %575 = vmatpush.bf16.msra.mxu0 %v493
    %576 = vmatpush.bf16.msra.mxu0 %v489
    %577 = vmatpush.bf16.msra.mxu0 %v485
    %578 = vmatpush.bf16.msra.mxu0 %v481
    %579 = vmatpush.bf16.msra.mxu0 %v477
    %580 = vmatpush.bf16.msra.mxu0 %v473
    %581 = vmatpush.bf16.msra.mxu0 %v469
    %582 = vmatpush.bf16.msra.mxu0 %v465
    %583 = vmatmul.bf16.gmra.mxu0 %v166
    %v584 = vpop.f32.mrf.mxu0
    %v585 = vadd.f32 %v571, %v584
    %v586 = vpop.f32.mrf.mxu0
    %v587 = vadd.f32 %v573, %v586
    %588 = vdwg.mxu0
    %589 = vmatpush.bf16.msra.mxu0 %v462
    %590 = vmatpush.bf16.msra.mxu0 %v458
    %591 = vmatpush.bf16.msra.mxu0 %v454
    %592 = vmatpush.bf16.msra.mxu0 %v450
    %593 = vmatpush.bf16.msra.mxu0 %v446
    %594 = vmatpush.bf16.msra.mxu0 %v442
    %595 = vmatpush.bf16.msra.mxu0 %v438
    %596 = vmatpush.bf16.msra.mxu0 %v434
    %597 = vmatmul.bf16.gmra.mxu0 %v165
    %v598 = vpop.f32.mrf.mxu0
    %v599 = vadd.f32 %v234, %v598
    %v600 = vpop.f32.mrf.mxu0
    %v601 = vadd.f32 %v234, %v600
    %602 = vdwg.mxu0
    %603 = vmatpush.bf16.msra.mxu0 %v494
    %604 = vmatpush.bf16.msra.mxu0 %v490
    %605 = vmatpush.bf16.msra.mxu0 %v486
    %606 = vmatpush.bf16.msra.mxu0 %v482
    %607 = vmatpush.bf16.msra.mxu0 %v478
    %608 = vmatpush.bf16.msra.mxu0 %v474
    %609 = vmatpush.bf16.msra.mxu0 %v470
    %610 = vmatpush.bf16.msra.mxu0 %v466
    %611 = vmatmul.bf16.gmra.mxu0 %v166
    %v612 = vpop.f32.mrf.mxu0
    %v613 = vadd.f32 %v599, %v612
    %v614 = vpop.f32.mrf.mxu0
    %v615 = vadd.f32 %v601, %v614
    %616 = vdwg.mxu0
    %617 = vmatpush.bf16.msra.mxu0 %v463
    %618 = vmatpush.bf16.msra.mxu0 %v459
    %619 = vmatpush.bf16.msra.mxu0 %v455
    %620 = vmatpush.bf16.msra.mxu0 %v451
    %621 = vmatpush.bf16.msra.mxu0 %v447
    %622 = vmatpush.bf16.msra.mxu0 %v443
    %623 = vmatpush.bf16.msra.mxu0 %v439
    %624 = vmatpush.bf16.msra.mxu0 %v435
    %625 = vmatmul.bf16.gmra.mxu0 %v165
    %v626 = vpop.f32.mrf.mxu0
    %v627 = vadd.f32 %v235, %v626
    %v628 = vpop.f32.mrf.mxu0
    %v629 = vadd.f32 %v235, %v628
    %630 = vdwg.mxu0
    %631 = vmatpush.bf16.msra.mxu0 %v495
    %632 = vmatpush.bf16.msra.mxu0 %v491
    %633 = vmatpush.bf16.msra.mxu0 %v487
    %634 = vmatpush.bf16.msra.mxu0 %v483
    %635 = vmatpush.bf16.msra.mxu0 %v479
    %636 = vmatpush.bf16.msra.mxu0 %v475
    %637 = vmatpush.bf16.msra.mxu0 %v471
    %638 = vmatpush.bf16.msra.mxu0 %v467
    %639 = vmatmul.bf16.gmra.mxu0 %v166
    %v640 = vpop.f32.mrf.mxu0
    %v641 = vadd.f32 %v627, %v640
    %v642 = vpop.f32.mrf.mxu0
    %v643 = vadd.f32 %v629, %v642
    %644 = vdwg.mxu0
    %645 = vmatpush.bf16.msra.mxu0 %v464
    %646 = vmatpush.bf16.msra.mxu0 %v460
    %647 = vmatpush.bf16.msra.mxu0 %v456
    %648 = vmatpush.bf16.msra.mxu0 %v452
    %649 = vmatpush.bf16.msra.mxu0 %v448
    %650 = vmatpush.bf16.msra.mxu0 %v444
    %651 = vmatpush.bf16.msra.mxu0 %v440
    %652 = vmatpush.bf16.msra.mxu0 %v436
    %653 = vmatmul.bf16.gmra.mxu0 %v165
    %v654 = vpop.f32.mrf.mxu0
    %v655 = vadd.f32 %v236, %v654
    %v656 = vpop.f32.mrf.mxu0
    %v657 = vadd.f32 %v236, %v656
    %658 = vdwg.mxu0
    %659 = vmatpush.bf16.msra.mxu0 %v496
    %660 = vmatpush.bf16.msra.mxu0 %v492
    %661 = vmatpush.bf16.msra.mxu0 %v488
    %662 = vmatpush.bf16.msra.mxu0 %v484
    %663 = vmatpush.bf16.msra.mxu0 %v480
    %664 = vmatpush.bf16.msra.mxu0 %v476
    %665 = vmatpush.bf16.msra.mxu0 %v472
    %666 = vmatpush.bf16.msra.mxu0 %v468
    %667 = vmatmul.bf16.gmra.mxu0 %v166
    %v668 = vpop.f32.mrf.mxu0
    %v669 = vadd.f32 %v655, %v668
    %v670 = vpop.f32.mrf.mxu0
    %v671 = vadd.f32 %v657, %v670
    %672 = vdwg.mxu0
    %v673 = vmax.f32 %v585, 0.0
    %v674 = vmax.f32 %v613, 0.0
    %v675 = vmax.f32 %v641, 0.0
    %v676 = vmax.f32 %v669, 0.0
    %v677 = vmax.f32 %v587, 0.0
    %v678 = vmax.f32 %v615, 0.0
    %v679 = vmax.f32 %v643, 0.0
    %v680 = vmax.f32 %v671, 0.0
    %v681 = vpack.c.bf16 %v677, %v673
    %v682 = vpack.c.bf16 %v678, %v674
    %v683 = vpack.c.bf16 %v679, %v675
    %v684 = vpack.c.bf16 %v680, %v676
    %v685 = vld [vmem:[#allocation6] sm:$0xff]
    %v686 = vld [vmem:[#allocation6 + $0x8] sm:$0xff]
    %v687 = vld [vmem:[#allocation6 + $0x10] sm:$0xff]
    %v688 = vld [vmem:[#allocation6 + $0x18] sm:$0xff]
    %v689 = vld [vmem:[#allocation6 + $0x20] sm:$0xff]
    %v690 = vld [vmem:[#allocation6 + $0x28] sm:$0xff]
    %v691 = vld [vmem:[#allocation6 + $0x30] sm:$0xff]
    %v692 = vld [vmem:[#allocation6 + $0x38] sm:$0xff]
    %v693 = vld [vmem:[#allocation6 + $0x40] sm:$0xff]
    %v694 = vld [vmem:[#allocation6 + $0x48] sm:$0xff]
    %v695 = vld [vmem:[#allocation6 + $0x50] sm:$0xff]
    %v696 = vld [vmem:[#allocation6 + $0x58] sm:$0xff]
    %v697 = vld [vmem:[#allocation6 + $0x60] sm:$0xff]
    %v698 = vld [vmem:[#allocation6 + $0x68] sm:$0xff]
    %v699 = vld [vmem:[#allocation6 + $0x70] sm:$0xff]
    %v700 = vld [vmem:[#allocation6 + $0x78] sm:$0xff]
    %v701 = vld [vmem:[#allocation6 + $0x80] sm:$0xff]
    %v702 = vld [vmem:[#allocation6 + $0x88] sm:$0xff]
    %v703 = vld [vmem:[#allocation6 + $0x90] sm:$0xff]
    %v704 = vld [vmem:[#allocation6 + $0x98] sm:$0xff]
    %v705 = vld [vmem:[#allocation6 + $0xa0] sm:$0xff]
    %v706 = vld [vmem:[#allocation6 + $0xa8] sm:$0xff]
    %v707 = vld [vmem:[#allocation6 + $0xb0] sm:$0xff]
    %v708 = vld [vmem:[#allocation6 + $0xb8] sm:$0xff]
    %v709 = vld [vmem:[#allocation6 + $0xc0] sm:$0xff]
    %v710 = vld [vmem:[#allocation6 + $0xc8] sm:$0xff]
    %v711 = vld [vmem:[#allocation6 + $0xd0] sm:$0xff]
    %v712 = vld [vmem:[#allocation6 + $0xd8] sm:$0xff]
    %v713 = vld [vmem:[#allocation6 + $0xe0] sm:$0xff]
    %v714 = vld [vmem:[#allocation6 + $0xe8] sm:$0xff]
    %v715 = vld [vmem:[#allocation6 + $0xf0] sm:$0xff]
    %v716 = vld [vmem:[#allocation6 + $0xf8] sm:$0xff]
    %v717 = vld [vmem:[#allocation6 + $0x100] sm:$0xff]
    %v718 = vld [vmem:[#allocation6 + $0x108] sm:$0xff]
    %v719 = vld [vmem:[#allocation6 + $0x110] sm:$0xff]
    %v720 = vld [vmem:[#allocation6 + $0x118] sm:$0xff]
    %v721 = vld [vmem:[#allocation6 + $0x120] sm:$0xff]
    %v722 = vld [vmem:[#allocation6 + $0x128] sm:$0xff]
    %v723 = vld [vmem:[#allocation6 + $0x130] sm:$0xff]
    %v724 = vld [vmem:[#allocation6 + $0x138] sm:$0xff]
    %v725 = vld [vmem:[#allocation6 + $0x140] sm:$0xff]
    %v726 = vld [vmem:[#allocation6 + $0x148] sm:$0xff]
    %v727 = vld [vmem:[#allocation6 + $0x150] sm:$0xff]
    %v728 = vld [vmem:[#allocation6 + $0x158] sm:$0xff]
    %v729 = vld [vmem:[#allocation6 + $0x160] sm:$0xff]
    %v730 = vld [vmem:[#allocation6 + $0x168] sm:$0xff]
    %v731 = vld [vmem:[#allocation6 + $0x170] sm:$0xff]
    %v732 = vld [vmem:[#allocation6 + $0x178] sm:$0xff]
    %v733 = vld [vmem:[#allocation6 + $0x180] sm:$0xff]
    %v734 = vld [vmem:[#allocation6 + $0x188] sm:$0xff]
    %v735 = vld [vmem:[#allocation6 + $0x190] sm:$0xff]
    %v736 = vld [vmem:[#allocation6 + $0x198] sm:$0xff]
    %v737 = vld [vmem:[#allocation6 + $0x1a0] sm:$0xff]
    %v738 = vld [vmem:[#allocation6 + $0x1a8] sm:$0xff]
    %v739 = vld [vmem:[#allocation6 + $0x1b0] sm:$0xff]
    %v740 = vld [vmem:[#allocation6 + $0x1b8] sm:$0xff]
    %v741 = vld [vmem:[#allocation6 + $0x1c0] sm:$0xff]
    %v742 = vld [vmem:[#allocation6 + $0x1c8] sm:$0xff]
    %v743 = vld [vmem:[#allocation6 + $0x1d0] sm:$0xff]
    %v744 = vld [vmem:[#allocation6 + $0x1d8] sm:$0xff]
    %v745 = vld [vmem:[#allocation6 + $0x1e0] sm:$0xff]
    %v746 = vld [vmem:[#allocation6 + $0x1e8] sm:$0xff]
    %v747 = vld [vmem:[#allocation6 + $0x1f0] sm:$0xff]
    %v748 = vld [vmem:[#allocation6 + $0x1f8] sm:$0xff]
    %v749 = vld [vmem:[#allocation6 + $0x200] sm:$0xff]
    %v750 = vld [vmem:[#allocation6 + $0x208] sm:$0xff]
    %v751 = vld [vmem:[#allocation6 + $0x210] sm:$0xff]
    %v752 = vld [vmem:[#allocation6 + $0x218] sm:$0xff]
    %v753 = vld [vmem:[#allocation6 + $0x220] sm:$0xff]
    %v754 = vld [vmem:[#allocation6 + $0x228] sm:$0xff]
    %v755 = vld [vmem:[#allocation6 + $0x230] sm:$0xff]
    %v756 = vld [vmem:[#allocation6 + $0x238] sm:$0xff]
    %v757 = vld [vmem:[#allocation6 + $0x240] sm:$0xff]
    %v758 = vld [vmem:[#allocation6 + $0x248] sm:$0xff]
    %v759 = vld [vmem:[#allocation6 + $0x250] sm:$0xff]
    %v760 = vld [vmem:[#allocation6 + $0x258] sm:$0xff]
    %v761 = vld [vmem:[#allocation6 + $0x260] sm:$0xff]
    %v762 = vld [vmem:[#allocation6 + $0x268] sm:$0xff]
    %v763 = vld [vmem:[#allocation6 + $0x270] sm:$0xff]
    %v764 = vld [vmem:[#allocation6 + $0x278] sm:$0xff]
    %v765 = vld [vmem:[#allocation6 + $0x280] sm:$0xff]
    %v766 = vld [vmem:[#allocation6 + $0x288] sm:$0xff]
    %v767 = vld [vmem:[#allocation6 + $0x290] sm:$0xff]
    %v768 = vld [vmem:[#allocation6 + $0x298] sm:$0xff]
    %v769 = vld [vmem:[#allocation6 + $0x2a0] sm:$0xff]
    %v770 = vld [vmem:[#allocation6 + $0x2a8] sm:$0xff]
    %v771 = vld [vmem:[#allocation6 + $0x2b0] sm:$0xff]
    %v772 = vld [vmem:[#allocation6 + $0x2b8] sm:$0xff]
    %v773 = vld [vmem:[#allocation6 + $0x2c0] sm:$0xff]
    %v774 = vld [vmem:[#allocation6 + $0x2c8] sm:$0xff]
    %v775 = vld [vmem:[#allocation6 + $0x2d0] sm:$0xff]
    %v776 = vld [vmem:[#allocation6 + $0x2d8] sm:$0xff]
    %v777 = vld [vmem:[#allocation6 + $0x2e0] sm:$0xff]
    %v778 = vld [vmem:[#allocation6 + $0x2e8] sm:$0xff]
    %v779 = vld [vmem:[#allocation6 + $0x2f0] sm:$0xff]
    %v780 = vld [vmem:[#allocation6 + $0x2f8] sm:$0xff]
    %v781 = vld [vmem:[#allocation6 + $0x300] sm:$0xff]
    %v782 = vld [vmem:[#allocation6 + $0x308] sm:$0xff]
    %v783 = vld [vmem:[#allocation6 + $0x310] sm:$0xff]
    %v784 = vld [vmem:[#allocation6 + $0x318] sm:$0xff]
    %v785 = vld [vmem:[#allocation6 + $0x320] sm:$0xff]
    %v786 = vld [vmem:[#allocation6 + $0x328] sm:$0xff]
    %v787 = vld [vmem:[#allocation6 + $0x330] sm:$0xff]
    %v788 = vld [vmem:[#allocation6 + $0x338] sm:$0xff]
    %v789 = vld [vmem:[#allocation6 + $0x340] sm:$0xff]
    %v790 = vld [vmem:[#allocation6 + $0x348] sm:$0xff]
    %v791 = vld [vmem:[#allocation6 + $0x350] sm:$0xff]
    %v792 = vld [vmem:[#allocation6 + $0x358] sm:$0xff]
    %v793 = vld [vmem:[#allocation6 + $0x360] sm:$0xff]
    %v794 = vld [vmem:[#allocation6 + $0x368] sm:$0xff]
    %v795 = vld [vmem:[#allocation6 + $0x370] sm:$0xff]
    %v796 = vld [vmem:[#allocation6 + $0x378] sm:$0xff]
    %v797 = vld [vmem:[#allocation6 + $0x380] sm:$0xff]
    %v798 = vld [vmem:[#allocation6 + $0x388] sm:$0xff]
    %v799 = vld [vmem:[#allocation6 + $0x390] sm:$0xff]
    %v800 = vld [vmem:[#allocation6 + $0x398] sm:$0xff]
    %v801 = vld [vmem:[#allocation6 + $0x3a0] sm:$0xff]
    %v802 = vld [vmem:[#allocation6 + $0x3a8] sm:$0xff]
    %v803 = vld [vmem:[#allocation6 + $0x3b0] sm:$0xff]
    %v804 = vld [vmem:[#allocation6 + $0x3b8] sm:$0xff]
    %v805 = vld [vmem:[#allocation6 + $0x3c0] sm:$0xff]
    %v806 = vld [vmem:[#allocation6 + $0x3c8] sm:$0xff]
    %v807 = vld [vmem:[#allocation6 + $0x3d0] sm:$0xff]
    %v808 = vld [vmem:[#allocation6 + $0x3d8] sm:$0xff]
    %v809 = vld [vmem:[#allocation6 + $0x3e0] sm:$0xff]
    %v810 = vld [vmem:[#allocation6 + $0x3e8] sm:$0xff]
    %v811 = vld [vmem:[#allocation6 + $0x3f0] sm:$0xff]
    %v812 = vld [vmem:[#allocation6 + $0x3f8] sm:$0xff]
    %v813 = vld [vmem:[%s6] sm:$0xf]
    %v815 = vperm.slane %v813, 0
    %v816 = vperm.slane %v813, 1
    %v817 = vperm.slane %v813, 2
    %v818 = vperm.slane %v813, 3
    %v951 = vunpack.c.l.b16 %v685
    %v952 = vunpack.c.h.b16 %v685
    %v953 = vunpack.c.l.b16 %v686
    %v954 = vunpack.c.h.b16 %v686
    %v955 = vunpack.c.l.b16 %v687
    %v956 = vunpack.c.h.b16 %v687
    %v957 = vunpack.c.l.b16 %v688
    %v958 = vunpack.c.h.b16 %v688
    %v959 = vunpack.c.l.b16 %v689
    %v960 = vunpack.c.h.b16 %v689
    %v961 = vunpack.c.l.b16 %v690
    %v962 = vunpack.c.h.b16 %v690
    %v963 = vunpack.c.l.b16 %v691
    %v964 = vunpack.c.h.b16 %v691
    %v965 = vunpack.c.l.b16 %v692
    %v966 = vunpack.c.h.b16 %v692
    %v967 = vunpack.c.l.b16 %v693
    %v968 = vunpack.c.h.b16 %v693
    %v969 = vunpack.c.l.b16 %v694
    %v970 = vunpack.c.h.b16 %v694
    %v971 = vunpack.c.l.b16 %v695
    %v972 = vunpack.c.h.b16 %v695
    %v973 = vunpack.c.l.b16 %v696
    %v974 = vunpack.c.h.b16 %v696
    %v975 = vunpack.c.l.b16 %v697
    %v976 = vunpack.c.h.b16 %v697
    %v977 = vunpack.c.l.b16 %v698
    %v978 = vunpack.c.h.b16 %v698
    %v979 = vunpack.c.l.b16 %v699
    %v980 = vunpack.c.h.b16 %v699
    %v981 = vunpack.c.l.b16 %v700
    %v982 = vunpack.c.h.b16 %v700
    %v983 = vunpack.c.l.b16 %v701
    %v984 = vunpack.c.h.b16 %v701
    %v985 = vunpack.c.l.b16 %v702
    %v986 = vunpack.c.h.b16 %v702
    %v987 = vunpack.c.l.b16 %v703
    %v988 = vunpack.c.h.b16 %v703
    %v989 = vunpack.c.l.b16 %v704
    %v990 = vunpack.c.h.b16 %v704
    %v991 = vunpack.c.l.b16 %v705
    %v992 = vunpack.c.h.b16 %v705
    %v993 = vunpack.c.l.b16 %v706
    %v994 = vunpack.c.h.b16 %v706
    %v995 = vunpack.c.l.b16 %v707
    %v996 = vunpack.c.h.b16 %v707
    %v997 = vunpack.c.l.b16 %v708
    %v998 = vunpack.c.h.b16 %v708
    %v999 = vunpack.c.l.b16 %v709
    %v1000 = vunpack.c.h.b16 %v709
    %v1001 = vunpack.c.l.b16 %v710
    %v1002 = vunpack.c.h.b16 %v710
    %v1003 = vunpack.c.l.b16 %v711
    %v1004 = vunpack.c.h.b16 %v711
    %v1005 = vunpack.c.l.b16 %v712
    %v1006 = vunpack.c.h.b16 %v712
    %v1007 = vunpack.c.l.b16 %v713
    %v1008 = vunpack.c.h.b16 %v713
    %v1009 = vunpack.c.l.b16 %v714
    %v1010 = vunpack.c.h.b16 %v714
    %v1011 = vunpack.c.l.b16 %v715
    %v1012 = vunpack.c.h.b16 %v715
    %v1013 = vunpack.c.l.b16 %v716
    %v1014 = vunpack.c.h.b16 %v716
    %v1015 = vunpack.c.l.b16 %v717
    %v1016 = vunpack.c.h.b16 %v717
    %v1017 = vunpack.c.l.b16 %v718
    %v1018 = vunpack.c.h.b16 %v718
    %v1019 = vunpack.c.l.b16 %v719
    %v1020 = vunpack.c.h.b16 %v719
    %v1021 = vunpack.c.l.b16 %v720
    %v1022 = vunpack.c.h.b16 %v720
    %v1023 = vunpack.c.l.b16 %v721
    %v1024 = vunpack.c.h.b16 %v721
    %v1025 = vunpack.c.l.b16 %v722
    %v1026 = vunpack.c.h.b16 %v722
    %v1027 = vunpack.c.l.b16 %v723
    %v1028 = vunpack.c.h.b16 %v723
    %v1029 = vunpack.c.l.b16 %v724
    %v1030 = vunpack.c.h.b16 %v724
    %v1031 = vunpack.c.l.b16 %v725
    %v1032 = vunpack.c.h.b16 %v725
    %v1033 = vunpack.c.l.b16 %v726
    %v1034 = vunpack.c.h.b16 %v726
    %v1035 = vunpack.c.l.b16 %v727
    %v1036 = vunpack.c.h.b16 %v727
    %v1037 = vunpack.c.l.b16 %v728
    %v1038 = vunpack.c.h.b16 %v728
    %v1039 = vunpack.c.l.b16 %v729
    %v1040 = vunpack.c.h.b16 %v729
    %v1041 = vunpack.c.l.b16 %v730
    %v1042 = vunpack.c.h.b16 %v730
    %v1043 = vunpack.c.l.b16 %v731
    %v1044 = vunpack.c.h.b16 %v731
    %v1045 = vunpack.c.l.b16 %v732
    %v1046 = vunpack.c.h.b16 %v732
    %v1047 = vunpack.c.l.b16 %v733
    %v1048 = vunpack.c.h.b16 %v733
    %v1049 = vunpack.c.l.b16 %v734
    %v1050 = vunpack.c.h.b16 %v734
    %v1051 = vunpack.c.l.b16 %v735
    %v1052 = vunpack.c.h.b16 %v735
    %v1053 = vunpack.c.l.b16 %v736
    %v1054 = vunpack.c.h.b16 %v736
    %v1055 = vunpack.c.l.b16 %v737
    %v1056 = vunpack.c.h.b16 %v737
    %v1057 = vunpack.c.l.b16 %v738
    %v1058 = vunpack.c.h.b16 %v738
    %v1059 = vunpack.c.l.b16 %v739
    %v1060 = vunpack.c.h.b16 %v739
    %v1061 = vunpack.c.l.b16 %v740
    %v1062 = vunpack.c.h.b16 %v740
    %v1063 = vunpack.c.l.b16 %v741
    %v1064 = vunpack.c.h.b16 %v741
    %v1065 = vunpack.c.l.b16 %v742
    %v1066 = vunpack.c.h.b16 %v742
    %v1067 = vunpack.c.l.b16 %v743
    %v1068 = vunpack.c.h.b16 %v743
    %v1069 = vunpack.c.l.b16 %v744
    %v1070 = vunpack.c.h.b16 %v744
    %v1071 = vunpack.c.l.b16 %v745
    %v1072 = vunpack.c.h.b16 %v745
    %v1073 = vunpack.c.l.b16 %v746
    %v1074 = vunpack.c.h.b16 %v746
    %v1075 = vunpack.c.l.b16 %v747
    %v1076 = vunpack.c.h.b16 %v747
    %v1077 = vunpack.c.l.b16 %v748
    %v1078 = vunpack.c.h.b16 %v748
    %v1079 = vunpack.c.l.b16 %v749
    %v1080 = vunpack.c.h.b16 %v749
    %v1081 = vunpack.c.l.b16 %v750
    %v1082 = vunpack.c.h.b16 %v750
    %v1083 = vunpack.c.l.b16 %v751
    %v1084 = vunpack.c.h.b16 %v751
    %v1085 = vunpack.c.l.b16 %v752
    %v1086 = vunpack.c.h.b16 %v752
    %v1087 = vunpack.c.l.b16 %v753
    %v1088 = vunpack.c.h.b16 %v753
    %v1089 = vunpack.c.l.b16 %v754
    %v1090 = vunpack.c.h.b16 %v754
    %v1091 = vunpack.c.l.b16 %v755
    %v1092 = vunpack.c.h.b16 %v755
    %v1093 = vunpack.c.l.b16 %v756
    %v1094 = vunpack.c.h.b16 %v756
    %v1095 = vunpack.c.l.b16 %v757
    %v1096 = vunpack.c.h.b16 %v757
    %v1097 = vunpack.c.l.b16 %v758
    %v1098 = vunpack.c.h.b16 %v758
    %v1099 = vunpack.c.l.b16 %v759
    %v1100 = vunpack.c.h.b16 %v759
    %v1101 = vunpack.c.l.b16 %v760
    %v1102 = vunpack.c.h.b16 %v760
    %v1103 = vunpack.c.l.b16 %v761
    %v1104 = vunpack.c.h.b16 %v761
    %v1105 = vunpack.c.l.b16 %v762
    %v1106 = vunpack.c.h.b16 %v762
    %v1107 = vunpack.c.l.b16 %v763
    %v1108 = vunpack.c.h.b16 %v763
    %v1109 = vunpack.c.l.b16 %v764
    %v1110 = vunpack.c.h.b16 %v764
    %v1111 = vunpack.c.l.b16 %v765
    %v1112 = vunpack.c.h.b16 %v765
    %v1113 = vunpack.c.l.b16 %v766
    %v1114 = vunpack.c.h.b16 %v766
    %v1115 = vunpack.c.l.b16 %v767
    %v1116 = vunpack.c.h.b16 %v767
    %v1117 = vunpack.c.l.b16 %v768
    %v1118 = vunpack.c.h.b16 %v768
    %v1119 = vunpack.c.l.b16 %v769
    %v1120 = vunpack.c.h.b16 %v769
    %v1121 = vunpack.c.l.b16 %v770
    %v1122 = vunpack.c.h.b16 %v770
    %v1123 = vunpack.c.l.b16 %v771
    %v1124 = vunpack.c.h.b16 %v771
    %v1125 = vunpack.c.l.b16 %v772
    %v1126 = vunpack.c.h.b16 %v772
    %v1127 = vunpack.c.l.b16 %v773
    %v1128 = vunpack.c.h.b16 %v773
    %v1129 = vunpack.c.l.b16 %v774
    %v1130 = vunpack.c.h.b16 %v774
    %v1131 = vunpack.c.l.b16 %v775
    %v1132 = vunpack.c.h.b16 %v775
    %v1133 = vunpack.c.l.b16 %v776
    %v1134 = vunpack.c.h.b16 %v776
    %v1135 = vunpack.c.l.b16 %v777
    %v1136 = vunpack.c.h.b16 %v777
    %v1137 = vunpack.c.l.b16 %v778
    %v1138 = vunpack.c.h.b16 %v778
    %v1139 = vunpack.c.l.b16 %v779
    %v1140 = vunpack.c.h.b16 %v779
    %v1141 = vunpack.c.l.b16 %v780
    %v1142 = vunpack.c.h.b16 %v780
    %v1143 = vunpack.c.l.b16 %v781
    %v1144 = vunpack.c.h.b16 %v781
    %v1145 = vunpack.c.l.b16 %v782
    %v1146 = vunpack.c.h.b16 %v782
    %v1147 = vunpack.c.l.b16 %v783
    %v1148 = vunpack.c.h.b16 %v783
    %v1149 = vunpack.c.l.b16 %v784
    %v1150 = vunpack.c.h.b16 %v784
    %v1151 = vunpack.c.l.b16 %v785
    %v1152 = vunpack.c.h.b16 %v785
    %v1153 = vunpack.c.l.b16 %v786
    %v1154 = vunpack.c.h.b16 %v786
    %v1155 = vunpack.c.l.b16 %v787
    %v1156 = vunpack.c.h.b16 %v787
    %v1157 = vunpack.c.l.b16 %v788
    %v1158 = vunpack.c.h.b16 %v788
    %v1159 = vunpack.c.l.b16 %v789
    %v1160 = vunpack.c.h.b16 %v789
    %v1161 = vunpack.c.l.b16 %v790
    %v1162 = vunpack.c.h.b16 %v790
    %v1163 = vunpack.c.l.b16 %v791
    %v1164 = vunpack.c.h.b16 %v791
    %v1165 = vunpack.c.l.b16 %v792
    %v1166 = vunpack.c.h.b16 %v792
    %v1167 = vunpack.c.l.b16 %v793
    %v1168 = vunpack.c.h.b16 %v793
    %v1169 = vunpack.c.l.b16 %v794
    %v1170 = vunpack.c.h.b16 %v794
    %v1171 = vunpack.c.l.b16 %v795
    %v1172 = vunpack.c.h.b16 %v795
    %v1173 = vunpack.c.l.b16 %v796
    %v1174 = vunpack.c.h.b16 %v796
    %v1175 = vunpack.c.l.b16 %v797
    %v1176 = vunpack.c.h.b16 %v797
    %v1177 = vunpack.c.l.b16 %v798
    %v1178 = vunpack.c.h.b16 %v798
    %v1179 = vunpack.c.l.b16 %v799
    %v1180 = vunpack.c.h.b16 %v799
    %v1181 = vunpack.c.l.b16 %v800
    %v1182 = vunpack.c.h.b16 %v800
    %v1183 = vunpack.c.l.b16 %v801
    %v1184 = vunpack.c.h.b16 %v801
    %v1185 = vunpack.c.l.b16 %v802
    %v1186 = vunpack.c.h.b16 %v802
    %v1187 = vunpack.c.l.b16 %v803
    %v1188 = vunpack.c.h.b16 %v803
    %v1189 = vunpack.c.l.b16 %v804
    %v1190 = vunpack.c.h.b16 %v804
    %v1191 = vunpack.c.l.b16 %v805
    %v1192 = vunpack.c.h.b16 %v805
    %v1193 = vunpack.c.l.b16 %v806
    %v1194 = vunpack.c.h.b16 %v806
    %v1195 = vunpack.c.l.b16 %v807
    %v1196 = vunpack.c.h.b16 %v807
    %v1197 = vunpack.c.l.b16 %v808
    %v1198 = vunpack.c.h.b16 %v808
    %v1199 = vunpack.c.l.b16 %v809
    %v1200 = vunpack.c.h.b16 %v809
    %v1201 = vunpack.c.l.b16 %v810
    %v1202 = vunpack.c.h.b16 %v810
    %v1203 = vunpack.c.l.b16 %v811
    %v1204 = vunpack.c.h.b16 %v811
    %v1205 = vunpack.c.l.b16 %v812
    %v1206 = vunpack.c.h.b16 %v812
    %v1207 = vpack.c.b16 %v955, %v951
    %v1208 = vpack.c.b16 %v956, %v952
    %v1209 = vpack.c.b16 %v957, %v953
    %v1210 = vpack.c.b16 %v958, %v954
    %v1211 = vpack.c.b16 %v963, %v959
    %v1212 = vpack.c.b16 %v964, %v960
    %v1213 = vpack.c.b16 %v965, %v961
    %v1214 = vpack.c.b16 %v966, %v962
    %v1215 = vpack.c.b16 %v971, %v967
    %v1216 = vpack.c.b16 %v972, %v968
    %v1217 = vpack.c.b16 %v973, %v969
    %v1218 = vpack.c.b16 %v974, %v970
    %v1219 = vpack.c.b16 %v979, %v975
    %v1220 = vpack.c.b16 %v980, %v976
    %v1221 = vpack.c.b16 %v981, %v977
    %v1222 = vpack.c.b16 %v982, %v978
    %v1223 = vpack.c.b16 %v987, %v983
    %v1224 = vpack.c.b16 %v988, %v984
    %v1225 = vpack.c.b16 %v989, %v985
    %v1226 = vpack.c.b16 %v990, %v986
    %v1227 = vpack.c.b16 %v995, %v991
    %v1228 = vpack.c.b16 %v996, %v992
    %v1229 = vpack.c.b16 %v997, %v993
    %v1230 = vpack.c.b16 %v998, %v994
    %v1231 = vpack.c.b16 %v1003, %v999
    %v1232 = vpack.c.b16 %v1004, %v1000
    %v1233 = vpack.c.b16 %v1005, %v1001
    %v1234 = vpack.c.b16 %v1006, %v1002
    %v1235 = vpack.c.b16 %v1011, %v1007
    %v1236 = vpack.c.b16 %v1012, %v1008
    %v1237 = vpack.c.b16 %v1013, %v1009
    %v1238 = vpack.c.b16 %v1014, %v1010
    %v1239 = vpack.c.b16 %v1019, %v1015
    %v1240 = vpack.c.b16 %v1020, %v1016
    %v1241 = vpack.c.b16 %v1021, %v1017
    %v1242 = vpack.c.b16 %v1022, %v1018
    %v1243 = vpack.c.b16 %v1027, %v1023
    %v1244 = vpack.c.b16 %v1028, %v1024
    %v1245 = vpack.c.b16 %v1029, %v1025
    %v1246 = vpack.c.b16 %v1030, %v1026
    %v1247 = vpack.c.b16 %v1035, %v1031
    %v1248 = vpack.c.b16 %v1036, %v1032
    %v1249 = vpack.c.b16 %v1037, %v1033
    %v1250 = vpack.c.b16 %v1038, %v1034
    %v1251 = vpack.c.b16 %v1043, %v1039
    %v1252 = vpack.c.b16 %v1044, %v1040
    %v1253 = vpack.c.b16 %v1045, %v1041
    %v1254 = vpack.c.b16 %v1046, %v1042
    %v1255 = vpack.c.b16 %v1051, %v1047
    %v1256 = vpack.c.b16 %v1052, %v1048
    %v1257 = vpack.c.b16 %v1053, %v1049
    %v1258 = vpack.c.b16 %v1054, %v1050
    %v1259 = vpack.c.b16 %v1059, %v1055
    %v1260 = vpack.c.b16 %v1060, %v1056
    %v1261 = vpack.c.b16 %v1061, %v1057
    %v1262 = vpack.c.b16 %v1062, %v1058
    %v1263 = vpack.c.b16 %v1067, %v1063
    %v1264 = vpack.c.b16 %v1068, %v1064
    %v1265 = vpack.c.b16 %v1069, %v1065
    %v1266 = vpack.c.b16 %v1070, %v1066
    %v1267 = vpack.c.b16 %v1075, %v1071
    %v1268 = vpack.c.b16 %v1076, %v1072
    %v1269 = vpack.c.b16 %v1077, %v1073
    %v1270 = vpack.c.b16 %v1078, %v1074
    %v1271 = vpack.c.b16 %v1083, %v1079
    %v1272 = vpack.c.b16 %v1084, %v1080
    %v1273 = vpack.c.b16 %v1085, %v1081
    %v1274 = vpack.c.b16 %v1086, %v1082
    %v1275 = vpack.c.b16 %v1091, %v1087
    %v1276 = vpack.c.b16 %v1092, %v1088
    %v1277 = vpack.c.b16 %v1093, %v1089
    %v1278 = vpack.c.b16 %v1094, %v1090
    %v1279 = vpack.c.b16 %v1099, %v1095
    %v1280 = vpack.c.b16 %v1100, %v1096
    %v1281 = vpack.c.b16 %v1101, %v1097
    %v1282 = vpack.c.b16 %v1102, %v1098
    %v1283 = vpack.c.b16 %v1107, %v1103
    %v1284 = vpack.c.b16 %v1108, %v1104
    %v1285 = vpack.c.b16 %v1109, %v1105
    %v1286 = vpack.c.b16 %v1110, %v1106
    %v1287 = vpack.c.b16 %v1115, %v1111
    %v1288 = vpack.c.b16 %v1116, %v1112
    %v1289 = vpack.c.b16 %v1117, %v1113
    %v1290 = vpack.c.b16 %v1118, %v1114
    %v1291 = vpack.c.b16 %v1123, %v1119
    %v1292 = vpack.c.b16 %v1124, %v1120
    %v1293 = vpack.c.b16 %v1125, %v1121
    %v1294 = vpack.c.b16 %v1126, %v1122
    %v1295 = vpack.c.b16 %v1131, %v1127
    %v1296 = vpack.c.b16 %v1132, %v1128
    %v1297 = vpack.c.b16 %v1133, %v1129
    %v1298 = vpack.c.b16 %v1134, %v1130
    %v1299 = vpack.c.b16 %v1139, %v1135
    %v1300 = vpack.c.b16 %v1140, %v1136
    %v1301 = vpack.c.b16 %v1141, %v1137
    %v1302 = vpack.c.b16 %v1142, %v1138
    %v1303 = vpack.c.b16 %v1147, %v1143
    %v1304 = vpack.c.b16 %v1148, %v1144
    %v1305 = vpack.c.b16 %v1149, %v1145
    %v1306 = vpack.c.b16 %v1150, %v1146
    %v1307 = vpack.c.b16 %v1155, %v1151
    %v1308 = vpack.c.b16 %v1156, %v1152
    %v1309 = vpack.c.b16 %v1157, %v1153
    %v1310 = vpack.c.b16 %v1158, %v1154
    %v1311 = vpack.c.b16 %v1163, %v1159
    %v1312 = vpack.c.b16 %v1164, %v1160
    %v1313 = vpack.c.b16 %v1165, %v1161
    %v1314 = vpack.c.b16 %v1166, %v1162
    %v1315 = vpack.c.b16 %v1171, %v1167
    %v1316 = vpack.c.b16 %v1172, %v1168
    %v1317 = vpack.c.b16 %v1173, %v1169
    %v1318 = vpack.c.b16 %v1174, %v1170
    %v1319 = vpack.c.b16 %v1179, %v1175
    %v1320 = vpack.c.b16 %v1180, %v1176
    %v1321 = vpack.c.b16 %v1181, %v1177
    %v1322 = vpack.c.b16 %v1182, %v1178
    %v1323 = vpack.c.b16 %v1187, %v1183
    %v1324 = vpack.c.b16 %v1188, %v1184
    %v1325 = vpack.c.b16 %v1189, %v1185
    %v1326 = vpack.c.b16 %v1190, %v1186
    %v1327 = vpack.c.b16 %v1195, %v1191
    %v1328 = vpack.c.b16 %v1196, %v1192
    %v1329 = vpack.c.b16 %v1197, %v1193
    %v1330 = vpack.c.b16 %v1198, %v1194
    %v1331 = vpack.c.b16 %v1203, %v1199
    %v1332 = vpack.c.b16 %v1204, %v1200
    %v1333 = vpack.c.b16 %v1205, %v1201
    %v1334 = vpack.c.b16 %v1206, %v1202
    %1463 = vmatpush.bf16.msra.mxu0 %v1235
    %1464 = vmatpush.bf16.msra.mxu0 %v1231
    %1465 = vmatpush.bf16.msra.mxu0 %v1227
    %1466 = vmatpush.bf16.msra.mxu0 %v1223
    %1467 = vmatpush.bf16.msra.mxu0 %v1219
    %1468 = vmatpush.bf16.msra.mxu0 %v1215
    %1469 = vmatpush.bf16.msra.mxu0 %v1211
    %1470 = vmatpush.bf16.msra.mxu0 %v1207
    %1471 = vmatmul.bf16.gmra.mxu0 %v681
    %v1472 = vpop.f32.mrf.mxu0
    %v1473 = vadd.f32 %v815, %v1472
    %v1474 = vpop.f32.mrf.mxu0
    %v1475 = vadd.f32 %v815, %v1474
    %1476 = vdwg.mxu0
    %1477 = vmatpush.bf16.msra.mxu0 %v1267
    %1478 = vmatpush.bf16.msra.mxu0 %v1263
    %1479 = vmatpush.bf16.msra.mxu0 %v1259
    %1480 = vmatpush.bf16.msra.mxu0 %v1255
    %1481 = vmatpush.bf16.msra.mxu0 %v1251
    %1482 = vmatpush.bf16.msra.mxu0 %v1247
    %1483 = vmatpush.bf16.msra.mxu0 %v1243
    %1484 = vmatpush.bf16.msra.mxu0 %v1239
    %1485 = vmatmul.bf16.gmra.mxu0 %v682
    %v1486 = vpop.f32.mrf.mxu0
    %v1487 = vadd.f32 %v1473, %v1486
    %v1488 = vpop.f32.mrf.mxu0
    %v1489 = vadd.f32 %v1475, %v1488
    %1490 = vdwg.mxu0
    %1491 = vmatpush.bf16.msra.mxu0 %v1299
    %1492 = vmatpush.bf16.msra.mxu0 %v1295
    %1493 = vmatpush.bf16.msra.mxu0 %v1291
    %1494 = vmatpush.bf16.msra.mxu0 %v1287
    %1495 = vmatpush.bf16.msra.mxu0 %v1283
    %1496 = vmatpush.bf16.msra.mxu0 %v1279
    %1497 = vmatpush.bf16.msra.mxu0 %v1275
    %1498 = vmatpush.bf16.msra.mxu0 %v1271
    %1499 = vmatmul.bf16.gmra.mxu0 %v683
    %v1500 = vpop.f32.mrf.mxu0
    %v1501 = vadd.f32 %v1487, %v1500
    %v1502 = vpop.f32.mrf.mxu0
    %v1503 = vadd.f32 %v1489, %v1502
    %1504 = vdwg.mxu0
    %1505 = vmatpush.bf16.msra.mxu0 %v1331
    %1506 = vmatpush.bf16.msra.mxu0 %v1327
    %1507 = vmatpush.bf16.msra.mxu0 %v1323
    %1508 = vmatpush.bf16.msra.mxu0 %v1319
    %1509 = vmatpush.bf16.msra.mxu0 %v1315
    %1510 = vmatpush.bf16.msra.mxu0 %v1311
    %1511 = vmatpush.bf16.msra.mxu0 %v1307
    %1512 = vmatpush.bf16.msra.mxu0 %v1303
    %1513 = vmatmul.bf16.gmra.mxu0 %v684
    %v1514 = vpop.f32.mrf.mxu0
    %v1515 = vadd.f32 %v1501, %v1514
    %v1516 = vpop.f32.mrf.mxu0
    %v1517 = vadd.f32 %v1503, %v1516
    %1518 = vdwg.mxu0
    %1519 = vmatpush.bf16.msra.mxu0 %v1236
    %1520 = vmatpush.bf16.msra.mxu0 %v1232
    %1521 = vmatpush.bf16.msra.mxu0 %v1228
    %1522 = vmatpush.bf16.msra.mxu0 %v1224
    %1523 = vmatpush.bf16.msra.mxu0 %v1220
    %1524 = vmatpush.bf16.msra.mxu0 %v1216
    %1525 = vmatpush.bf16.msra.mxu0 %v1212
    %1526 = vmatpush.bf16.msra.mxu0 %v1208
    %1527 = vmatmul.bf16.gmra.mxu0 %v681
    %v1528 = vpop.f32.mrf.mxu0
    %v1529 = vadd.f32 %v816, %v1528
    %v1530 = vpop.f32.mrf.mxu0
    %v1531 = vadd.f32 %v816, %v1530
    %1532 = vdwg.mxu0
    %1533 = vmatpush.bf16.msra.mxu0 %v1268
    %1534 = vmatpush.bf16.msra.mxu0 %v1264
    %1535 = vmatpush.bf16.msra.mxu0 %v1260
    %1536 = vmatpush.bf16.msra.mxu0 %v1256
    %1537 = vmatpush.bf16.msra.mxu0 %v1252
    %1538 = vmatpush.bf16.msra.mxu0 %v1248
    %1539 = vmatpush.bf16.msra.mxu0 %v1244
    %1540 = vmatpush.bf16.msra.mxu0 %v1240
    %1541 = vmatmul.bf16.gmra.mxu0 %v682
    %v1542 = vpop.f32.mrf.mxu0
    %v1543 = vadd.f32 %v1529, %v1542
    %v1544 = vpop.f32.mrf.mxu0
    %v1545 = vadd.f32 %v1531, %v1544
    %1546 = vdwg.mxu0
    %1547 = vmatpush.bf16.msra.mxu0 %v1300
    %1548 = vmatpush.bf16.msra.mxu0 %v1296
    %1549 = vmatpush.bf16.msra.mxu0 %v1292
    %1550 = vmatpush.bf16.msra.mxu0 %v1288
    %1551 = vmatpush.bf16.msra.mxu0 %v1284
    %1552 = vmatpush.bf16.msra.mxu0 %v1280
    %1553 = vmatpush.bf16.msra.mxu0 %v1276
    %1554 = vmatpush.bf16.msra.mxu0 %v1272
    %1555 = vmatmul.bf16.gmra.mxu0 %v683
    %v1556 = vpop.f32.mrf.mxu0
    %v1557 = vadd.f32 %v1543, %v1556
    %v1558 = vpop.f32.mrf.mxu0
    %v1559 = vadd.f32 %v1545, %v1558
    %1560 = vdwg.mxu0
    %1561 = vmatpush.bf16.msra.mxu0 %v1332
    %1562 = vmatpush.bf16.msra.mxu0 %v1328
    %1563 = vmatpush.bf16.msra.mxu0 %v1324
    %1564 = vmatpush.bf16.msra.mxu0 %v1320
    %1565 = vmatpush.bf16.msra.mxu0 %v1316
    %1566 = vmatpush.bf16.msra.mxu0 %v1312
    %1567 = vmatpush.bf16.msra.mxu0 %v1308
    %1568 = vmatpush.bf16.msra.mxu0 %v1304
    %1569 = vmatmul.bf16.gmra.mxu0 %v684
    %v1570 = vpop.f32.mrf.mxu0
    %v1571 = vadd.f32 %v1557, %v1570
    %v1572 = vpop.f32.mrf.mxu0
    %v1573 = vadd.f32 %v1559, %v1572
    %1574 = vdwg.mxu0
    %1575 = vmatpush.bf16.msra.mxu0 %v1237
    %1576 = vmatpush.bf16.msra.mxu0 %v1233
    %1577 = vmatpush.bf16.msra.mxu0 %v1229
    %1578 = vmatpush.bf16.msra.mxu0 %v1225
    %1579 = vmatpush.bf16.msra.mxu0 %v1221
    %1580 = vmatpush.bf16.msra.mxu0 %v1217
    %1581 = vmatpush.bf16.msra.mxu0 %v1213
    %1582 = vmatpush.bf16.msra.mxu0 %v1209
    %1583 = vmatmul.bf16.gmra.mxu0 %v681
    %v1584 = vpop.f32.mrf.mxu0
    %v1585 = vadd.f32 %v817, %v1584
    %v1586 = vpop.f32.mrf.mxu0
    %v1587 = vadd.f32 %v817, %v1586
    %1588 = vdwg.mxu0
    %1589 = vmatpush.bf16.msra.mxu0 %v1269
    %1590 = vmatpush.bf16.msra.mxu0 %v1265
    %1591 = vmatpush.bf16.msra.mxu0 %v1261
    %1592 = vmatpush.bf16.msra.mxu0 %v1257
    %1593 = vmatpush.bf16.msra.mxu0 %v1253
    %1594 = vmatpush.bf16.msra.mxu0 %v1249
    %1595 = vmatpush.bf16.msra.mxu0 %v1245
    %1596 = vmatpush.bf16.msra.mxu0 %v1241
    %1597 = vmatmul.bf16.gmra.mxu0 %v682
    %v1598 = vpop.f32.mrf.mxu0
    %v1599 = vadd.f32 %v1585, %v1598
    %v1600 = vpop.f32.mrf.mxu0
    %v1601 = vadd.f32 %v1587, %v1600
    %1602 = vdwg.mxu0
    %1603 = vmatpush.bf16.msra.mxu0 %v1301
    %1604 = vmatpush.bf16.msra.mxu0 %v1297
    %1605 = vmatpush.bf16.msra.mxu0 %v1293
    %1606 = vmatpush.bf16.msra.mxu0 %v1289
    %1607 = vmatpush.bf16.msra.mxu0 %v1285
    %1608 = vmatpush.bf16.msra.mxu0 %v1281
    %1609 = vmatpush.bf16.msra.mxu0 %v1277
    %1610 = vmatpush.bf16.msra.mxu0 %v1273
    %1611 = vmatmul.bf16.gmra.mxu0 %v683
    %v1612 = vpop.f32.mrf.mxu0
    %v1613 = vadd.f32 %v1599, %v1612
    %v1614 = vpop.f32.mrf.mxu0
    %v1615 = vadd.f32 %v1601, %v1614
    %1616 = vdwg.mxu0
    %1617 = vmatpush.bf16.msra.mxu0 %v1333
    %1618 = vmatpush.bf16.msra.mxu0 %v1329
    %1619 = vmatpush.bf16.msra.mxu0 %v1325
    %1620 = vmatpush.bf16.msra.mxu0 %v1321
    %1621 = vmatpush.bf16.msra.mxu0 %v1317
    %1622 = vmatpush.bf16.msra.mxu0 %v1313
    %1623 = vmatpush.bf16.msra.mxu0 %v1309
    %1624 = vmatpush.bf16.msra.mxu0 %v1305
    %1625 = vmatmul.bf16.gmra.mxu0 %v684
    %v1626 = vpop.f32.mrf.mxu0
    %v1627 = vadd.f32 %v1613, %v1626
    %v1628 = vpop.f32.mrf.mxu0
    %v1629 = vadd.f32 %v1615, %v1628
    %1630 = vdwg.mxu0
    %1631 = vmatpush.bf16.msra.mxu0 %v1238
    %1632 = vmatpush.bf16.msra.mxu0 %v1234
    %1633 = vmatpush.bf16.msra.mxu0 %v1230
    %1634 = vmatpush.bf16.msra.mxu0 %v1226
    %1635 = vmatpush.bf16.msra.mxu0 %v1222
    %1636 = vmatpush.bf16.msra.mxu0 %v1218
    %1637 = vmatpush.bf16.msra.mxu0 %v1214
    %1638 = vmatpush.bf16.msra.mxu0 %v1210
    %1639 = vmatmul.bf16.gmra.mxu0 %v681
    %v1640 = vpop.f32.mrf.mxu0
    %v1641 = vadd.f32 %v818, %v1640
    %v1642 = vpop.f32.mrf.mxu0
    %v1643 = vadd.f32 %v818, %v1642
    %1644 = vdwg.mxu0
    %1645 = vmatpush.bf16.msra.mxu0 %v1270
    %1646 = vmatpush.bf16.msra.mxu0 %v1266
    %1647 = vmatpush.bf16.msra.mxu0 %v1262
    %1648 = vmatpush.bf16.msra.mxu0 %v1258
    %1649 = vmatpush.bf16.msra.mxu0 %v1254
    %1650 = vmatpush.bf16.msra.mxu0 %v1250
    %1651 = vmatpush.bf16.msra.mxu0 %v1246
    %1652 = vmatpush.bf16.msra.mxu0 %v1242
    %1653 = vmatmul.bf16.gmra.mxu0 %v682
    %v1654 = vpop.f32.mrf.mxu0
    %v1655 = vadd.f32 %v1641, %v1654
    %v1656 = vpop.f32.mrf.mxu0
    %v1657 = vadd.f32 %v1643, %v1656
    %1658 = vdwg.mxu0
    %1659 = vmatpush.bf16.msra.mxu0 %v1302
    %1660 = vmatpush.bf16.msra.mxu0 %v1298
    %1661 = vmatpush.bf16.msra.mxu0 %v1294
    %1662 = vmatpush.bf16.msra.mxu0 %v1290
    %1663 = vmatpush.bf16.msra.mxu0 %v1286
    %1664 = vmatpush.bf16.msra.mxu0 %v1282
    %1665 = vmatpush.bf16.msra.mxu0 %v1278
    %1666 = vmatpush.bf16.msra.mxu0 %v1274
    %1667 = vmatmul.bf16.gmra.mxu0 %v683
    %v1668 = vpop.f32.mrf.mxu0
    %v1669 = vadd.f32 %v1655, %v1668
    %v1670 = vpop.f32.mrf.mxu0
    %v1671 = vadd.f32 %v1657, %v1670
    %1672 = vdwg.mxu0
    %1673 = vmatpush.bf16.msra.mxu0 %v1334
    %1674 = vmatpush.bf16.msra.mxu0 %v1330
    %1675 = vmatpush.bf16.msra.mxu0 %v1326
    %1676 = vmatpush.bf16.msra.mxu0 %v1322
    %1677 = vmatpush.bf16.msra.mxu0 %v1318
    %1678 = vmatpush.bf16.msra.mxu0 %v1314
    %1679 = vmatpush.bf16.msra.mxu0 %v1310
    %1680 = vmatpush.bf16.msra.mxu0 %v1306
    %1681 = vmatmul.bf16.gmra.mxu0 %v684
    %v1682 = vpop.f32.mrf.mxu0
    %v1683 = vadd.f32 %v1669, %v1682
    %v1684 = vpop.f32.mrf.mxu0
    %v1685 = vadd.f32 %v1671, %v1684
    %1686 = vdwg.mxu0
    %v1687 = vmax.f32 %v1515, 0.0
    %v1688 = vmax.f32 %v1571, 0.0
    %v1689 = vmax.f32 %v1627, 0.0
    %v1690 = vmax.f32 %v1683, 0.0
    %v1691 = vmax.f32 %v1517, 0.0
    %v1692 = vmax.f32 %v1573, 0.0
    %v1693 = vmax.f32 %v1629, 0.0
    %v1694 = vmax.f32 %v1685, 0.0
    %v1695 = vpack.c.bf16 %v1691, %v1687
    %v1696 = vpack.c.bf16 %v1692, %v1688
    %v1697 = vpack.c.bf16 %v1693, %v1689
    %v1698 = vpack.c.bf16 %v1694, %v1690
    %v1699 = vld [vmem:[#allocation7] sm:$0xf]
    %v1700 = vld [vmem:[#allocation7 + $0x4] sm:$0xf]
    %v1701 = vld [vmem:[#allocation7 + $0x8] sm:$0xf]
    %v1702 = vld [vmem:[#allocation7 + $0xc] sm:$0xf]
    %v1703 = vld [vmem:[#allocation7 + $0x10] sm:$0xf]
    %v1704 = vld [vmem:[#allocation7 + $0x14] sm:$0xf]
    %v1705 = vld [vmem:[#allocation7 + $0x18] sm:$0xf]
    %v1706 = vld [vmem:[#allocation7 + $0x1c] sm:$0xf]
    %v1707 = vld [vmem:[#allocation7 + $0x20] sm:$0xf]
    %v1708 = vld [vmem:[#allocation7 + $0x24] sm:$0xf]
    %v1709 = vld [vmem:[#allocation7 + $0x28] sm:$0xf]
    %v1710 = vld [vmem:[#allocation7 + $0x2c] sm:$0xf]
    %v1711 = vld [vmem:[#allocation7 + $0x30] sm:$0xf]
    %v1712 = vld [vmem:[#allocation7 + $0x34] sm:$0xf]
    %v1713 = vld [vmem:[#allocation7 + $0x38] sm:$0xf]
    %v1714 = vld [vmem:[#allocation7 + $0x3c] sm:$0xf]
    %v1715 = vld [vmem:[#allocation7 + $0x40] sm:$0xf]
    %v1716 = vld [vmem:[#allocation7 + $0x44] sm:$0xf]
    %v1717 = vld [vmem:[#allocation7 + $0x48] sm:$0xf]
    %v1718 = vld [vmem:[#allocation7 + $0x4c] sm:$0xf]
    %v1719 = vld [vmem:[#allocation7 + $0x50] sm:$0xf]
    %v1720 = vld [vmem:[#allocation7 + $0x54] sm:$0xf]
    %v1721 = vld [vmem:[#allocation7 + $0x58] sm:$0xf]
    %v1722 = vld [vmem:[#allocation7 + $0x5c] sm:$0xf]
    %v1723 = vld [vmem:[#allocation7 + $0x60] sm:$0xf]
    %v1724 = vld [vmem:[#allocation7 + $0x64] sm:$0xf]
    %v1725 = vld [vmem:[#allocation7 + $0x68] sm:$0xf]
    %v1726 = vld [vmem:[#allocation7 + $0x6c] sm:$0xf]
    %v1727 = vld [vmem:[#allocation7 + $0x70] sm:$0xf]
    %v1728 = vld [vmem:[#allocation7 + $0x74] sm:$0xf]
    %v1729 = vld [vmem:[#allocation7 + $0x78] sm:$0xf]
    %v1730 = vld [vmem:[#allocation7 + $0x7c] sm:$0xf]
    %v1731 = vld [vmem:[#allocation7 + $0x80] sm:$0xf]
    %v1732 = vld [vmem:[#allocation7 + $0x84] sm:$0xf]
    %v1733 = vld [vmem:[#allocation7 + $0x88] sm:$0xf]
    %v1734 = vld [vmem:[#allocation7 + $0x8c] sm:$0xf]
    %v1735 = vld [vmem:[#allocation7 + $0x90] sm:$0xf]
    %v1736 = vld [vmem:[#allocation7 + $0x94] sm:$0xf]
    %v1737 = vld [vmem:[#allocation7 + $0x98] sm:$0xf]
    %v1738 = vld [vmem:[#allocation7 + $0x9c] sm:$0xf]
    %v1739 = vld [vmem:[#allocation7 + $0xa0] sm:$0xf]
    %v1740 = vld [vmem:[#allocation7 + $0xa4] sm:$0xf]
    %v1741 = vld [vmem:[#allocation7 + $0xa8] sm:$0xf]
    %v1742 = vld [vmem:[#allocation7 + $0xac] sm:$0xf]
    %v1743 = vld [vmem:[#allocation7 + $0xb0] sm:$0xf]
    %v1744 = vld [vmem:[#allocation7 + $0xb4] sm:$0xf]
    %v1745 = vld [vmem:[#allocation7 + $0xb8] sm:$0xf]
    %v1746 = vld [vmem:[#allocation7 + $0xbc] sm:$0xf]
    %v1747 = vld [vmem:[#allocation7 + $0xc0] sm:$0xf]
    %v1748 = vld [vmem:[#allocation7 + $0xc4] sm:$0xf]
    %v1749 = vld [vmem:[#allocation7 + $0xc8] sm:$0xf]
    %v1750 = vld [vmem:[#allocation7 + $0xcc] sm:$0xf]
    %v1751 = vld [vmem:[#allocation7 + $0xd0] sm:$0xf]
    %v1752 = vld [vmem:[#allocation7 + $0xd4] sm:$0xf]
    %v1753 = vld [vmem:[#allocation7 + $0xd8] sm:$0xf]
    %v1754 = vld [vmem:[#allocation7 + $0xdc] sm:$0xf]
    %v1755 = vld [vmem:[#allocation7 + $0xe0] sm:$0xf]
    %v1756 = vld [vmem:[#allocation7 + $0xe4] sm:$0xf]
    %v1757 = vld [vmem:[#allocation7 + $0xe8] sm:$0xf]
    %v1758 = vld [vmem:[#allocation7 + $0xec] sm:$0xf]
    %v1759 = vld [vmem:[#allocation7 + $0xf0] sm:$0xf]
    %v1760 = vld [vmem:[#allocation7 + $0xf4] sm:$0xf]
    %v1761 = vld [vmem:[#allocation7 + $0xf8] sm:$0xf]
    %v1762 = vld [vmem:[#allocation7 + $0xfc] sm:$0xf]
    %v1763 = vld [vmem:[%s8] sm:$0x1]
    %v1765 = vperm.slane %v1763, 0
    %v1831 = vunpack.c.l.b16 %v1699
    %v1832 = vunpack.c.l.b16 %v1700
    %v1833 = vunpack.c.l.b16 %v1701
    %v1834 = vunpack.c.l.b16 %v1702
    %v1835 = vunpack.c.l.b16 %v1703
    %v1836 = vunpack.c.l.b16 %v1704
    %v1837 = vunpack.c.l.b16 %v1705
    %v1838 = vunpack.c.l.b16 %v1706
    %v1839 = vunpack.c.l.b16 %v1707
    %v1840 = vunpack.c.l.b16 %v1708
    %v1841 = vunpack.c.l.b16 %v1709
    %v1842 = vunpack.c.l.b16 %v1710
    %v1843 = vunpack.c.l.b16 %v1711
    %v1844 = vunpack.c.l.b16 %v1712
    %v1845 = vunpack.c.l.b16 %v1713
    %v1846 = vunpack.c.l.b16 %v1714
    %v1847 = vunpack.c.l.b16 %v1715
    %v1848 = vunpack.c.l.b16 %v1716
    %v1849 = vunpack.c.l.b16 %v1717
    %v1850 = vunpack.c.l.b16 %v1718
    %v1851 = vunpack.c.l.b16 %v1719
    %v1852 = vunpack.c.l.b16 %v1720
    %v1853 = vunpack.c.l.b16 %v1721
    %v1854 = vunpack.c.l.b16 %v1722
    %v1855 = vunpack.c.l.b16 %v1723
    %v1856 = vunpack.c.l.b16 %v1724
    %v1857 = vunpack.c.l.b16 %v1725
    %v1858 = vunpack.c.l.b16 %v1726
    %v1859 = vunpack.c.l.b16 %v1727
    %v1860 = vunpack.c.l.b16 %v1728
    %v1861 = vunpack.c.l.b16 %v1729
    %v1862 = vunpack.c.l.b16 %v1730
    %v1863 = vunpack.c.l.b16 %v1731
    %v1864 = vunpack.c.l.b16 %v1732
    %v1865 = vunpack.c.l.b16 %v1733
    %v1866 = vunpack.c.l.b16 %v1734
    %v1867 = vunpack.c.l.b16 %v1735
    %v1868 = vunpack.c.l.b16 %v1736
    %v1869 = vunpack.c.l.b16 %v1737
    %v1870 = vunpack.c.l.b16 %v1738
    %v1871 = vunpack.c.l.b16 %v1739
    %v1872 = vunpack.c.l.b16 %v1740
    %v1873 = vunpack.c.l.b16 %v1741
    %v1874 = vunpack.c.l.b16 %v1742
    %v1875 = vunpack.c.l.b16 %v1743
    %v1876 = vunpack.c.l.b16 %v1744
    %v1877 = vunpack.c.l.b16 %v1745
    %v1878 = vunpack.c.l.b16 %v1746
    %v1879 = vunpack.c.l.b16 %v1747
    %v1880 = vunpack.c.l.b16 %v1748
    %v1881 = vunpack.c.l.b16 %v1749
    %v1882 = vunpack.c.l.b16 %v1750
    %v1883 = vunpack.c.l.b16 %v1751
    %v1884 = vunpack.c.l.b16 %v1752
    %v1885 = vunpack.c.l.b16 %v1753
    %v1886 = vunpack.c.l.b16 %v1754
    %v1887 = vunpack.c.l.b16 %v1755
    %v1888 = vunpack.c.l.b16 %v1756
    %v1889 = vunpack.c.l.b16 %v1757
    %v1890 = vunpack.c.l.b16 %v1758
    %v1891 = vunpack.c.l.b16 %v1759
    %v1892 = vunpack.c.l.b16 %v1760
    %v1893 = vunpack.c.l.b16 %v1761
    %v1894 = vunpack.c.l.b16 %v1762
    %v1895 = vpack.c.b16 %v1832, %v1831
    %v1896 = vpack.c.b16 %v1834, %v1833
    %v1897 = vpack.c.b16 %v1836, %v1835
    %v1898 = vpack.c.b16 %v1838, %v1837
    %v1899 = vpack.c.b16 %v1840, %v1839
    %v1900 = vpack.c.b16 %v1842, %v1841
    %v1901 = vpack.c.b16 %v1844, %v1843
    %v1902 = vpack.c.b16 %v1846, %v1845
    %v1903 = vpack.c.b16 %v1848, %v1847
    %v1904 = vpack.c.b16 %v1850, %v1849
    %v1905 = vpack.c.b16 %v1852, %v1851
    %v1906 = vpack.c.b16 %v1854, %v1853
    %v1907 = vpack.c.b16 %v1856, %v1855
    %v1908 = vpack.c.b16 %v1858, %v1857
    %v1909 = vpack.c.b16 %v1860, %v1859
    %v1910 = vpack.c.b16 %v1862, %v1861
    %v1911 = vpack.c.b16 %v1864, %v1863
    %v1912 = vpack.c.b16 %v1866, %v1865
    %v1913 = vpack.c.b16 %v1868, %v1867
    %v1914 = vpack.c.b16 %v1870, %v1869
    %v1915 = vpack.c.b16 %v1872, %v1871
    %v1916 = vpack.c.b16 %v1874, %v1873
    %v1917 = vpack.c.b16 %v1876, %v1875
    %v1918 = vpack.c.b16 %v1878, %v1877
    %v1919 = vpack.c.b16 %v1880, %v1879
    %v1920 = vpack.c.b16 %v1882, %v1881
    %v1921 = vpack.c.b16 %v1884, %v1883
    %v1922 = vpack.c.b16 %v1886, %v1885
    %v1923 = vpack.c.b16 %v1888, %v1887
    %v1924 = vpack.c.b16 %v1890, %v1889
    %v1925 = vpack.c.b16 %v1892, %v1891
    %v1926 = vpack.c.b16 %v1894, %v1893
    %1959 = vmatpush.bf16.msra.mxu0 %v1902
    %1960 = vmatpush.bf16.msra.mxu0 %v1901
    %1961 = vmatpush.bf16.msra.mxu0 %v1900
    %1962 = vmatpush.bf16.msra.mxu0 %v1899
    %1963 = vmatpush.bf16.msra.mxu0 %v1898
    %1964 = vmatpush.bf16.msra.mxu0 %v1897
    %1965 = vmatpush.bf16.msra.mxu0 %v1896
    %1966 = vmatpush.bf16.msra.mxu0 %v1895
    %1967 = vmatmul.bf16.gmra.mxu0 %v1695
    %v1968 = vpop.f32.mrf.mxu0
    %v1969 = vadd.f32 %v1765, %v1968
    %v1970 = vpop.f32.mrf.mxu0
    %v1971 = vadd.f32 %v1765, %v1970
    %1972 = vdwg.mxu0
    %1973 = vmatpush.bf16.msra.mxu0 %v1910
    %1974 = vmatpush.bf16.msra.mxu0 %v1909
    %1975 = vmatpush.bf16.msra.mxu0 %v1908
    %1976 = vmatpush.bf16.msra.mxu0 %v1907
    %1977 = vmatpush.bf16.msra.mxu0 %v1906
    %1978 = vmatpush.bf16.msra.mxu0 %v1905
    %1979 = vmatpush.bf16.msra.mxu0 %v1904
    %1980 = vmatpush.bf16.msra.mxu0 %v1903
    %1981 = vmatmul.bf16.gmra.mxu0 %v1696
    %v1982 = vpop.f32.mrf.mxu0
    %v1983 = vadd.f32 %v1969, %v1982
    %v1984 = vpop.f32.mrf.mxu0
    %v1985 = vadd.f32 %v1971, %v1984
    %1986 = vdwg.mxu0
    %1987 = vmatpush.bf16.msra.mxu0 %v1918
    %1988 = vmatpush.bf16.msra.mxu0 %v1917
    %1989 = vmatpush.bf16.msra.mxu0 %v1916
    %1990 = vmatpush.bf16.msra.mxu0 %v1915
    %1991 = vmatpush.bf16.msra.mxu0 %v1914
    %1992 = vmatpush.bf16.msra.mxu0 %v1913
    %1993 = vmatpush.bf16.msra.mxu0 %v1912
    %1994 = vmatpush.bf16.msra.mxu0 %v1911
    %1995 = vmatmul.bf16.gmra.mxu0 %v1697
    %v1996 = vpop.f32.mrf.mxu0
    %v1997 = vadd.f32 %v1983, %v1996
    %v1998 = vpop.f32.mrf.mxu0
    %v1999 = vadd.f32 %v1985, %v1998
    %2000 = vdwg.mxu0
    %2001 = vmatpush.bf16.msra.mxu0 %v1926
    %2002 = vmatpush.bf16.msra.mxu0 %v1925
    %2003 = vmatpush.bf16.msra.mxu0 %v1924
    %2004 = vmatpush.bf16.msra.mxu0 %v1923
    %2005 = vmatpush.bf16.msra.mxu0 %v1922
    %2006 = vmatpush.bf16.msra.mxu0 %v1921
    %2007 = vmatpush.bf16.msra.mxu0 %v1920
    %2008 = vmatpush.bf16.msra.mxu0 %v1919
    %2009 = vmatmul.bf16.gmra.mxu0 %v1698
    %v2010 = vpop.f32.mrf.mxu0
    %v2011 = vadd.f32 %v1997, %v2010
    %v2012 = vpop.f32.mrf.mxu0
    %v2013 = vadd.f32 %v1999, %v2012
    %2014 = vdwg.mxu0
    %v2015 = vmax.f32 %v2011, 0.0
    %v2016 = vmax.f32 %v2013, 0.0
    %v2017 = vsub.f32 0.0, %v2015
    %v2018 = vsub.f32 0.0, %v2016
    %v2019 = vmul.f32 %v2017, 1.442695
    %v2020 = vpow.pop %v2019
    %v2021 = vmul.f32 %v2018, 1.442695
    %v2022 = vpow.pop %v2021
    %v2023 = vadd.f32 %v2020, 1.0
    %v2024 = vadd.f32 %v2022, 1.0
    %v2025 = vrcp.pop %v2023
    %v2026 = vrcp.pop %v2024
    %v2027 = vpack.c.bf16 %v2025, %v2025
    %v2028 = vpack.c.bf16 %v2026, %v2026
    %2029 = vst [vmem:[%s9] sm:$0xf] %v2027
    %2030 = vst [vmem:[%s9 + $0x4] sm:$0xf] %v2028
    // Predicated region
    $region54: #{mlp_forward.1} parent=1 // pred_check
      _
    $region55: #{mlp_forward.1} parent=1 // pred_check_branch
      %2032 = sbr.rel (0) target = $region57
    $region56: #{mlp_forward.1} parent=1 // pred_region
      _
    $region57: #{mlp_forward.1} parent=1 // pred_fallthru
      _
    // Predicated region
    $region58: #{mlp_forward.1} parent=1 // pred_check
      _
    $region59: #{mlp_forward.1} parent=1 // pred_check_branch
      %2034 = sbr.rel (0) target = $region61
    $region60: #{mlp_forward.1} parent=1 // pred_region
      _
    $region61: #{mlp_forward.1} parent=1 // pred_fallthru
      _
    %2035 = vsyncpa [#allocation3], 1
    %2036 = vsyncpa [#allocation5], 1
    %2037 = vsyncpa [#allocation8], 1

</llo_original>
